<compile_context>
chip_gen: v5e
topology: v5e:2x2
jax: 0.10.0
libtpu: 0.0.40
codegen_flags: <defaults>
</compile_context>

<pallas_src>
import math

import jax
import jax.numpy as jnp
from jax.experimental import pallas as pl
from jax.experimental.pallas import tpu as pltpu


def cheb_conv_sat_kernel(x_ref, att_t_ref, cheb_t_ref, theta_ref, o_ref, acc_ref):
    # x_ref:      (Bb, N, T*F_in_p)     bf16  graph signal, flat (t, f) lanes
    # att_t_ref:  (Bb, N, N)            bf16  spatial attention, transposed (A_b^T)
    # cheb_t_ref: (K, N, N)             bf16  Chebyshev polynomials, transposed (T_k^T)
    # theta_ref:  (K, F_in_p, F_out_p)  bf16  per-order weights (zero-padded)
    # o_ref:      (Bb, N, T*F_out_p)    f32   output
    # acc_ref:    (Bb, N, T*F_out_p)    f32   VMEM accumulator scratch
    num_k, f_in_p, f_out_p = theta_ref.shape
    t_steps = x_ref.shape[-1] // f_in_p

    x = x_ref[...]                                   # bf16
    att_t = att_t_ref[...].astype(jnp.float32)       # f32 VPU multiply (v5e-safe)

    acc_ref[...] = jnp.zeros_like(acc_ref)

    for k in range(num_k):                           # K is small (2-3): static unroll
        # (T_k ⊙ A_b)^T == T_k^T ⊙ A_b^T : cheap elementwise multiply on the VPU.
        masked_t = (cheb_t_ref[k].astype(jnp.float32)[None, :, :] * att_t
                    ).astype(jnp.bfloat16)           # (Bb, N, N)

        # Dominant MXU matmul, lane-dense rhs:
        #   rhs[b, i, (t, f)] = sum_j masked_t[b, i, j] * x[b, j, (t, f)]
        rhs = jax.lax.dot_general(
            masked_t, x,
            dimension_numbers=(((2,), (1,)), ((0,), (0,))),
            preferred_element_type=jnp.float32,
        ).astype(jnp.bfloat16)                       # (Bb, N, T*F_in_p)

        theta_k = theta_ref[k]                       # (F_in_p, F_out_p) bf16
        for t in range(t_steps):                     # per-time Theta apply: contract F_in only
            rhs_t = rhs[:, :, t * f_in_p:(t + 1) * f_in_p]       # (Bb, N, F_in_p)
            out_t = jax.lax.dot_general(
                rhs_t, theta_k,
                dimension_numbers=(((2,), (0,)), ((), ())),
                preferred_element_type=jnp.float32,
            )                                                     # (Bb, N, F_out_p)
            acc_ref[:, :, t * f_out_p:(t + 1) * f_out_p] += out_t

    o_ref[...] = jnp.maximum(acc_ref[...], 0.0).astype(o_ref.dtype)


def _round_up(x, m):
    return ((x + m - 1) // m) * m


def _pad_last(a, size):
    if a.shape[-1] == size:
        return a
    widths = [(0, 0)] * (a.ndim - 1) + [(0, size - a.shape[-1])]
    return jnp.pad(a, widths)


def _vmem_capacity_bytes():
    """Physical VMEM of the attached TPU (conservative fallback if unknown)."""
    try:
        return int(pltpu.get_tpu_info().vmem_capacity_bytes)
    except Exception:
        return 64 * 1024 * 1024      # v7x per-TensorCore VMEM; safe for v5e/v6e too


def _pick_batch_block(batch, n, c_in, c_out, num_k, f_in_p, f_out_p, vmem_bytes):
    """Largest per-step batch block that fits the VMEM budget, then megacore cap."""
    # Bytes per unit of bb: batch-blocked operands are double-buffered by the
    # pipeline; matmul temporaries get f32-sized headroom.
    per_b = (2 * n * c_in * 2            # x tile (bf16), double-buffered
             + 2 * n * n * 2             # attention tile (bf16), double-buffered
             + 2 * n * c_out * 4         # output tile (f32), double-buffered
             + n * c_out * 4             # f32 accumulator scratch
             + n * (c_in + c_out) * 4)   # matmul temporaries headroom
    fixed = num_k * n * n * 2 + num_k * f_in_p * f_out_p * 2   # single-buffered constants
    budget = int(vmem_bytes * 0.5) - fixed
    bb = max(1, budget // max(per_b, 1))
    bb = int(min(bb, 8, batch))          # 8 batch rows amortize the ~0.35us/step overhead
    bb = min(bb, max(1, -(-batch // 2))) # keep >= 2 grid steps so both v7x TCs get work
    while bb & (bb - 1):                 # power of two -> clean batch padding
        bb -= 1
    return max(int(bb), 1)


def _const_block_spec(shape):
    """BlockSpec for a grid-invariant input; single-buffered when supported."""
    index_map = lambda b: (0,) * len(shape)
    try:
        return pl.BlockSpec(shape, index_map, pipeline_mode=pl.Buffered(1))
    except Exception:                    # pipeline_mode unsupported in this JAX
        return pl.BlockSpec(shape, index_map)


def cheb_conv_with_sat(x, spatial_attention, cheb_polynomials, thetas):
    """Forward pass of ChebConvWithSAt.

    x: (B, N, F_in, T); spatial_attention: (B, N, N)
    cheb_polynomials: list of K (N, N); thetas: list of K (F_in, F_out)
    Returns: (B, N, F_out, T) float32 (same as the PyTorch module).
    """
    B, N, F_in, T = x.shape
    K = len(cheb_polynomials)
    F_out = thetas[0].shape[1]

    # Pad feature dims so the flattened lane dims T*F are multiples of 128.
    unit = 128 // math.gcd(T, 128)
    f_in_p = _round_up(F_in, unit)
    f_out_p = _round_up(F_out, unit)
    c_in = T * f_in_p
    c_out = T * f_out_p

    # Lane-dense activations: (B, N, T, F_in_p) flattened to (t, f) lanes, bf16 operands.
    x_tf = _pad_last(jnp.swapaxes(x.astype(jnp.float32), 2, 3), f_in_p)   # (B, N, T, F_in_p)
    x_flat = x_tf.reshape(B, N, c_in).astype(jnp.bfloat16)
    att_t = jnp.swapaxes(spatial_attention.astype(jnp.float32), 1, 2).astype(jnp.bfloat16)

    # Weight-side precompute: transposed Chebyshev polynomials + zero-padded Theta.
    cheb_t = jnp.stack([jnp.asarray(t_k, jnp.float32).T for t_k in cheb_polynomials]
                       ).astype(jnp.bfloat16)                              # (K, N, N)
    theta = jnp.stack([jnp.asarray(th, jnp.float32) for th in thetas])     # (K, F_in, F_out)
    theta = jnp.pad(theta, ((0, 0), (0, f_in_p - F_in), (0, f_out_p - F_out))
                    ).astype(jnp.bfloat16)                                 # (K, F_in_p, F_out_p)

    # Batch blocking from the VMEM budget; pad B to a multiple of bb.
    vmem_bytes = _vmem_capacity_bytes()
    bb = _pick_batch_block(B, N, c_in, c_out, K, f_in_p, f_out_p, vmem_bytes)
    b_pad = _round_up(B, bb)
    if b_pad != B:
        pad = ((0, b_pad - B), (0, 0), (0, 0))
        x_flat = jnp.pad(x_flat, pad)
        att_t = jnp.pad(att_t, pad)
    grid = (b_pad // bb,)

    out_flat = pl.pallas_call(
        cheb_conv_sat_kernel,
        out_shape=jax.ShapeDtypeStruct((b_pad, N, c_out), jnp.float32),
        grid_spec=pltpu.PrefetchScalarGridSpec(
            num_scalar_prefetch=0,
            grid=grid,
            in_specs=[
                pl.BlockSpec((bb, N, c_in), lambda b: (b, 0, 0)),
                pl.BlockSpec((bb, N, N), lambda b: (b, 0, 0)),
                _const_block_spec((K, N, N)),
                _const_block_spec((K, f_in_p, f_out_p)),
            ],
            out_specs=pl.BlockSpec((bb, N, c_out), lambda b: (b, 0, 0)),
            scratch_shapes=[pltpu.VMEM((bb, N, c_out), jnp.float32)],
        ),
        compiler_params=pltpu.CompilerParams(
            dimension_semantics=("parallel",),
            vmem_limit_bytes=int(min(vmem_bytes, 128 * 1024 * 1024) * 0.85),
        ),
    )(x_flat, att_t, cheb_t, theta)

    # (b_pad, N, T*F_out_p) -> (B, N, F_out, T): strip padding, restore layout.
    out = out_flat[:B].reshape(B, N, T, f_out_p)[..., :F_out]
    return jnp.swapaxes(out, 2, 3)


def cheb_conv_with_sat_ref(x, spatial_attention, cheb_polynomials, thetas):
    """Pure-JAX reference mirroring the PyTorch forward loop exactly (f32)."""
    B, N, F_in, T = x.shape
    K = len(cheb_polynomials)
    F_out = thetas[0].shape[1]
    hi = jax.lax.Precision.HIGHEST
    outputs = []
    for t in range(T):
        graph_signal = x[:, :, :, t]                                       # (B, N, F_in)
        out = jnp.zeros((B, N, F_out), jnp.float32)
        for k in range(K):
            t_k_with_at = cheb_polynomials[k][None, :, :] * spatial_attention  # (B, N, N)
            rhs = jnp.einsum('bji,bjf->bif', t_k_with_at, graph_signal, precision=hi)
            out = out + jnp.einsum('bif,fo->bio', rhs, thetas[k], precision=hi)
        outputs.append(out[..., None])
    return jax.nn.relu(jnp.concatenate(outputs, axis=-1))


if __name__ == "__main__":
    B, N, F_in, T = 2, 16, 4, 8
    K, F_out = 3, 8

    key = jax.random.PRNGKey(0)
    k_adj, k_x, k_att, *k_th = jax.random.split(key, 3 + K)

    # Chebyshev polynomials of a scaled Laplacian of a random graph.
    adj = jax.random.uniform(k_adj, (N, N), dtype=jnp.float32)
    adj = (adj + adj.T) * 0.5
    lap = jnp.diag(jnp.sum(adj, axis=1)) - adj
    lam_max = jnp.max(jnp.linalg.eigvalsh(lap))
    l_tilde = (2.0 / lam_max) * lap - jnp.eye(N, dtype=jnp.float32)
    cheb_polynomials = [jnp.eye(N, dtype=jnp.float32), l_tilde]
    for _ in range(2, K):
        cheb_polynomials.append(2.0 * l_tilde @ cheb_polynomials[-1] - cheb_polynomials[-2])
    cheb_polynomials = cheb_polynomials[:K]

    x = jax.random.normal(k_x, (B, N, F_in, T), dtype=jnp.float32)
    spatial_attention = jax.nn.softmax(
        jax.random.normal(k_att, (B, N, N), dtype=jnp.float32), axis=1)
    thetas = [jax.random.normal(k_th[i], (F_in, F_out), dtype=jnp.float32) * 0.1
              for i in range(K)]

    out = cheb_conv_with_sat(x, spatial_attention, cheb_polynomials, thetas)
    out = jax.block_until_ready(out)

    ref = cheb_conv_with_sat_ref(x, spatial_attention, cheb_polynomials, thetas)
    assert out.shape == (B, N, F_out, T)
    assert jnp.allclose(out, ref, atol=2e-2, rtol=2e-2), (
        "mismatch vs reference: max abs err = "
        f"{float(jnp.max(jnp.abs(out - ref))):.4e}")

    print("KERNEL_OK")
</pallas_src>

<mosaic_0001>
module attributes {stable_mosaic.version = 11 : i64} {
  func.func @cheb_conv_sat_kernel(%arg0: i32, %arg1: memref<1x16x128xbf16, #tpu.memory_space<vmem>>, %arg2: memref<1x16x16xbf16, #tpu.memory_space<vmem>>, %arg3: memref<3x16x16xbf16, #tpu.memory_space<vmem>>, %arg4: memref<3x16x16xbf16, #tpu.memory_space<vmem>>, %arg5: memref<1x16x128xf32, #tpu.memory_space<vmem>>, %arg6: memref<1x16x128xf32, #tpu.memory_space<vmem>>) attributes {dimension_semantics = [#tpu.dimension_semantics<parallel>], iteration_bounds = array<i64: 2>, scalar_prefetch = 0 : i64, scratch_operands = 1 : i64, tpu.core_type = #tpu.core_type<tc>, window_params = [{transform_indices = @transform_0, window_bounds = array<i64: 1, 16, 128>}, {transform_indices = @transform_1, window_bounds = array<i64: 1, 16, 16>}, {pipeline_mode = #tpu.pipeline_mode<synchronous>, transform_indices = @transform_2, window_bounds = array<i64: 3, 16, 16>}, {pipeline_mode = #tpu.pipeline_mode<synchronous>, transform_indices = @transform_3, window_bounds = array<i64: 3, 16, 16>}, {transform_indices = @transform_4, window_bounds = array<i64: 1, 16, 128>}]} {
    %c0 = arith.constant 0 : index
    %c0_0 = arith.constant 0 : index
    %c0_1 = arith.constant 0 : index
    %0 = vector.load %arg1[%c0, %c0_0, %c0_1] : memref<1x16x128xbf16, #tpu.memory_space<vmem>>, vector<1x16x128xbf16>
    %c0_2 = arith.constant 0 : index
    %c0_3 = arith.constant 0 : index
    %c0_4 = arith.constant 0 : index
    %1 = vector.load %arg2[%c0_2, %c0_3, %c0_4] : memref<1x16x16xbf16, #tpu.memory_space<vmem>>, vector<1x16x16xbf16>
    %2 = arith.extf %1 : vector<1x16x16xbf16> to vector<1x16x16xf32>
    %cst = arith.constant 0.000000e+00 : f32
    %3 = vector.broadcast %cst : f32 to vector<1x16x128xf32>
    %c0_5 = arith.constant 0 : index
    %c0_6 = arith.constant 0 : index
    %c0_7 = arith.constant 0 : index
    %4 = vector.load %arg6[%c0_5, %c0_6, %c0_7] : memref<1x16x128xf32, #tpu.memory_space<vmem>>, vector<1x16x128xf32>
    tpu.vector_store %arg6[%c0_5, %c0_6, %c0_7], %3 {strides = array<i32>} : memref<1x16x128xf32, #tpu.memory_space<vmem>>, vector<1x16x128xf32>,
    %c0_8 = arith.constant 0 : index
    %c0_9 = arith.constant 0 : index
    %c0_10 = arith.constant 0 : index
    %5 = vector.load %arg3[%c0_8, %c0_9, %c0_10] : memref<3x16x16xbf16, #tpu.memory_space<vmem>>, vector<1x16x16xbf16>
    %6 = vector.shape_cast %5 : vector<1x16x16xbf16> to vector<16x16xbf16>
    %7 = arith.extf %6 : vector<16x16xbf16> to vector<16x16xf32>
    %8 = vector.shape_cast %7 : vector<16x16xf32> to vector<1x16x16xf32>
    %9 = arith.mulf %8, %2 : vector<1x16x16xf32>
    %10 = arith.truncf %9 : vector<1x16x16xf32> to vector<1x16x16xbf16>
    %cst_11 = arith.constant dense<0.000000e+00> : vector<1x16x128xf32>
    %11 = tpu.matmul %10, %0, %cst_11 {dimension_numbers = #tpu.dot_dimension_numbers<[2], [1], [1], [2], [0, 0, 0, 1, 1, 2], [0], [0]>} : vector<1x16x16xbf16>, vector<1x16x128xbf16>, vector<1x16x128xf32> -> vector<1x16x128xf32>
    %12 = arith.truncf %11 : vector<1x16x128xf32> to vector<1x16x128xbf16>
    %c0_12 = arith.constant 0 : index
    %c0_13 = arith.constant 0 : index
    %c0_14 = arith.constant 0 : index
    %13 = vector.load %arg4[%c0_12, %c0_13, %c0_14] : memref<3x16x16xbf16, #tpu.memory_space<vmem>>, vector<1x16x16xbf16>
    %14 = vector.shape_cast %13 : vector<1x16x16xbf16> to vector<16x16xbf16>
    %15 = vector.extract_strided_slice %12 {offsets = [0, 0, 0], sizes = [1, 16, 16], strides = [1, 1, 1]} : vector<1x16x128xbf16> to vector<1x16x16xbf16>
    %cst_15 = arith.constant dense<0.000000e+00> : vector<1x16x16xf32>
    %16 = tpu.matmul %15, %14, %cst_15 {dimension_numbers = #tpu.dot_dimension_numbers<[2], [0], [0, 1], [1], [0, 0, 0, 1, 1, 1], [], []>} : vector<1x16x16xbf16>, vector<16x16xbf16>, vector<1x16x16xf32> -> vector<1x16x16xf32>
    %c0_16 = arith.constant 0 : index
    %c0_17 = arith.constant 0 : index
    %c0_18 = arith.constant 0 : index
    %17 = vector.load %arg6[%c0_16, %c0_17, %c0_18] : memref<1x16x128xf32, #tpu.memory_space<vmem>>, vector<1x16x16xf32>
    %18 = arith.addf %17, %16 : vector<1x16x16xf32>
    %c0_19 = arith.constant 0 : index
    %c0_20 = arith.constant 0 : index
    %c0_21 = arith.constant 0 : index
    %19 = vector.load %arg6[%c0_19, %c0_20, %c0_21] : memref<1x16x128xf32, #tpu.memory_space<vmem>>, vector<1x16x16xf32>
    tpu.vector_store %arg6[%c0_19, %c0_20, %c0_21], %18 {strides = array<i32>} : memref<1x16x128xf32, #tpu.memory_space<vmem>>, vector<1x16x16xf32>,
    %20 = vector.extract_strided_slice %12 {offsets = [0, 0, 16], sizes = [1, 16, 16], strides = [1, 1, 1]} : vector<1x16x128xbf16> to vector<1x16x16xbf16>
    %cst_22 = arith.constant dense<0.000000e+00> : vector<1x16x16xf32>
    %21 = tpu.matmul %20, %14, %cst_22 {dimension_numbers = #tpu.dot_dimension_numbers<[2], [0], [0, 1], [1], [0, 0, 0, 1, 1, 1], [], []>} : vector<1x16x16xbf16>, vector<16x16xbf16>, vector<1x16x16xf32> -> vector<1x16x16xf32>
    %c0_23 = arith.constant 0 : index
    %c0_24 = arith.constant 0 : index
    %c16 = arith.constant 16 : index
    %22 = vector.load %arg6[%c0_23, %c0_24, %c16] : memref<1x16x128xf32, #tpu.memory_space<vmem>>, vector<1x16x16xf32>
    %23 = arith.addf %22, %21 : vector<1x16x16xf32>
    %c0_25 = arith.constant 0 : index
    %c0_26 = arith.constant 0 : index
    %c16_27 = arith.constant 16 : index
    %24 = vector.load %arg6[%c0_25, %c0_26, %c16_27] : memref<1x16x128xf32, #tpu.memory_space<vmem>>, vector<1x16x16xf32>
    tpu.vector_store %arg6[%c0_25, %c0_26, %c16_27], %23 {strides = array<i32>} : memref<1x16x128xf32, #tpu.memory_space<vmem>>, vector<1x16x16xf32>,
    %25 = vector.extract_strided_slice %12 {offsets = [0, 0, 32], sizes = [1, 16, 16], strides = [1, 1, 1]} : vector<1x16x128xbf16> to vector<1x16x16xbf16>
    %cst_28 = arith.constant dense<0.000000e+00> : vector<1x16x16xf32>
    %26 = tpu.matmul %25, %14, %cst_28 {dimension_numbers = #tpu.dot_dimension_numbers<[2], [0], [0, 1], [1], [0, 0, 0, 1, 1, 1], [], []>} : vector<1x16x16xbf16>, vector<16x16xbf16>, vector<1x16x16xf32> -> vector<1x16x16xf32>
    %c0_29 = arith.constant 0 : index
    %c0_30 = arith.constant 0 : index
    %c32 = arith.constant 32 : index
    %27 = vector.load %arg6[%c0_29, %c0_30, %c32] : memref<1x16x128xf32, #tpu.memory_space<vmem>>, vector<1x16x16xf32>
    %28 = arith.addf %27, %26 : vector<1x16x16xf32>
    %c0_31 = arith.constant 0 : index
    %c0_32 = arith.constant 0 : index
    %c32_33 = arith.constant 32 : index
    %29 = vector.load %arg6[%c0_31, %c0_32, %c32_33] : memref<1x16x128xf32, #tpu.memory_space<vmem>>, vector<1x16x16xf32>
    tpu.vector_store %arg6[%c0_31, %c0_32, %c32_33], %28 {strides = array<i32>} : memref<1x16x128xf32, #tpu.memory_space<vmem>>, vector<1x16x16xf32>,
    %30 = vector.extract_strided_slice %12 {offsets = [0, 0, 48], sizes = [1, 16, 16], strides = [1, 1, 1]} : vector<1x16x128xbf16> to vector<1x16x16xbf16>
    %cst_34 = arith.constant dense<0.000000e+00> : vector<1x16x16xf32>
    %31 = tpu.matmul %30, %14, %cst_34 {dimension_numbers = #tpu.dot_dimension_numbers<[2], [0], [0, 1], [1], [0, 0, 0, 1, 1, 1], [], []>} : vector<1x16x16xbf16>, vector<16x16xbf16>, vector<1x16x16xf32> -> vector<1x16x16xf32>
    %c0_35 = arith.constant 0 : index
    %c0_36 = arith.constant 0 : index
    %c48 = arith.constant 48 : index
    %32 = vector.load %arg6[%c0_35, %c0_36, %c48] : memref<1x16x128xf32, #tpu.memory_space<vmem>>, vector<1x16x16xf32>
    %33 = arith.addf %32, %31 : vector<1x16x16xf32>
    %c0_37 = arith.constant 0 : index
    %c0_38 = arith.constant 0 : index
    %c48_39 = arith.constant 48 : index
    %34 = vector.load %arg6[%c0_37, %c0_38, %c48_39] : memref<1x16x128xf32, #tpu.memory_space<vmem>>, vector<1x16x16xf32>
    tpu.vector_store %arg6[%c0_37, %c0_38, %c48_39], %33 {strides = array<i32>} : memref<1x16x128xf32, #tpu.memory_space<vmem>>, vector<1x16x16xf32>,
    %35 = vector.extract_strided_slice %12 {offsets = [0, 0, 64], sizes = [1, 16, 16], strides = [1, 1, 1]} : vector<1x16x128xbf16> to vector<1x16x16xbf16>
    %cst_40 = arith.constant dense<0.000000e+00> : vector<1x16x16xf32>
    %36 = tpu.matmul %35, %14, %cst_40 {dimension_numbers = #tpu.dot_dimension_numbers<[2], [0], [0, 1], [1], [0, 0, 0, 1, 1, 1], [], []>} : vector<1x16x16xbf16>, vector<16x16xbf16>, vector<1x16x16xf32> -> vector<1x16x16xf32>
    %c0_41 = arith.constant 0 : index
    %c0_42 = arith.constant 0 : index
    %c64 = arith.constant 64 : index
    %37 = vector.load %arg6[%c0_41, %c0_42, %c64] : memref<1x16x128xf32, #tpu.memory_space<vmem>>, vector<1x16x16xf32>
    %38 = arith.addf %37, %36 : vector<1x16x16xf32>
    %c0_43 = arith.constant 0 : index
    %c0_44 = arith.constant 0 : index
    %c64_45 = arith.constant 64 : index
    %39 = vector.load %arg6[%c0_43, %c0_44, %c64_45] : memref<1x16x128xf32, #tpu.memory_space<vmem>>, vector<1x16x16xf32>
    tpu.vector_store %arg6[%c0_43, %c0_44, %c64_45], %38 {strides = array<i32>} : memref<1x16x128xf32, #tpu.memory_space<vmem>>, vector<1x16x16xf32>,
    %40 = vector.extract_strided_slice %12 {offsets = [0, 0, 80], sizes = [1, 16, 16], strides = [1, 1, 1]} : vector<1x16x128xbf16> to vector<1x16x16xbf16>
    %cst_46 = arith.constant dense<0.000000e+00> : vector<1x16x16xf32>
    %41 = tpu.matmul %40, %14, %cst_46 {dimension_numbers = #tpu.dot_dimension_numbers<[2], [0], [0, 1], [1], [0, 0, 0, 1, 1, 1], [], []>} : vector<1x16x16xbf16>, vector<16x16xbf16>, vector<1x16x16xf32> -> vector<1x16x16xf32>
    %c0_47 = arith.constant 0 : index
    %c0_48 = arith.constant 0 : index
    %c80 = arith.constant 80 : index
    %42 = vector.load %arg6[%c0_47, %c0_48, %c80] : memref<1x16x128xf32, #tpu.memory_space<vmem>>, vector<1x16x16xf32>
    %43 = arith.addf %42, %41 : vector<1x16x16xf32>
    %c0_49 = arith.constant 0 : index
    %c0_50 = arith.constant 0 : index
    %c80_51 = arith.constant 80 : index
    %44 = vector.load %arg6[%c0_49, %c0_50, %c80_51] : memref<1x16x128xf32, #tpu.memory_space<vmem>>, vector<1x16x16xf32>
    tpu.vector_store %arg6[%c0_49, %c0_50, %c80_51], %43 {strides = array<i32>} : memref<1x16x128xf32, #tpu.memory_space<vmem>>, vector<1x16x16xf32>,
    %45 = vector.extract_strided_slice %12 {offsets = [0, 0, 96], sizes = [1, 16, 16], strides = [1, 1, 1]} : vector<1x16x128xbf16> to vector<1x16x16xbf16>
    %cst_52 = arith.constant dense<0.000000e+00> : vector<1x16x16xf32>
    %46 = tpu.matmul %45, %14, %cst_52 {dimension_numbers = #tpu.dot_dimension_numbers<[2], [0], [0, 1], [1], [0, 0, 0, 1, 1, 1], [], []>} : vector<1x16x16xbf16>, vector<16x16xbf16>, vector<1x16x16xf32> -> vector<1x16x16xf32>
    %c0_53 = arith.constant 0 : index
    %c0_54 = arith.constant 0 : index
    %c96 = arith.constant 96 : index
    %47 = vector.load %arg6[%c0_53, %c0_54, %c96] : memref<1x16x128xf32, #tpu.memory_space<vmem>>, vector<1x16x16xf32>
    %48 = arith.addf %47, %46 : vector<1x16x16xf32>
    %c0_55 = arith.constant 0 : index
    %c0_56 = arith.constant 0 : index
    %c96_57 = arith.constant 96 : index
    %49 = vector.load %arg6[%c0_55, %c0_56, %c96_57] : memref<1x16x128xf32, #tpu.memory_space<vmem>>, vector<1x16x16xf32>
    tpu.vector_store %arg6[%c0_55, %c0_56, %c96_57], %48 {strides = array<i32>} : memref<1x16x128xf32, #tpu.memory_space<vmem>>, vector<1x16x16xf32>,
    %50 = vector.extract_strided_slice %12 {offsets = [0, 0, 112], sizes = [1, 16, 16], strides = [1, 1, 1]} : vector<1x16x128xbf16> to vector<1x16x16xbf16>
    %cst_58 = arith.constant dense<0.000000e+00> : vector<1x16x16xf32>
    %51 = tpu.matmul %50, %14, %cst_58 {dimension_numbers = #tpu.dot_dimension_numbers<[2], [0], [0, 1], [1], [0, 0, 0, 1, 1, 1], [], []>} : vector<1x16x16xbf16>, vector<16x16xbf16>, vector<1x16x16xf32> -> vector<1x16x16xf32>
    %c0_59 = arith.constant 0 : index
    %c0_60 = arith.constant 0 : index
    %c112 = arith.constant 112 : index
    %52 = vector.load %arg6[%c0_59, %c0_60, %c112] : memref<1x16x128xf32, #tpu.memory_space<vmem>>, vector<1x16x16xf32>
    %53 = arith.addf %52, %51 : vector<1x16x16xf32>
    %c0_61 = arith.constant 0 : index
    %c0_62 = arith.constant 0 : index
    %c112_63 = arith.constant 112 : index
    %54 = vector.load %arg6[%c0_61, %c0_62, %c112_63] : memref<1x16x128xf32, #tpu.memory_space<vmem>>, vector<1x16x16xf32>
    tpu.vector_store %arg6[%c0_61, %c0_62, %c112_63], %53 {strides = array<i32>} : memref<1x16x128xf32, #tpu.memory_space<vmem>>, vector<1x16x16xf32>,
    %c1 = arith.constant 1 : index
    %c0_64 = arith.constant 0 : index
    %c0_65 = arith.constant 0 : index
    %55 = vector.load %arg3[%c1, %c0_64, %c0_65] : memref<3x16x16xbf16, #tpu.memory_space<vmem>>, vector<1x16x16xbf16>
    %56 = vector.shape_cast %55 : vector<1x16x16xbf16> to vector<16x16xbf16>
    %57 = arith.extf %56 : vector<16x16xbf16> to vector<16x16xf32>
    %58 = vector.shape_cast %57 : vector<16x16xf32> to vector<1x16x16xf32>
    %59 = arith.mulf %58, %2 : vector<1x16x16xf32>
    %60 = arith.truncf %59 : vector<1x16x16xf32> to vector<1x16x16xbf16>
    %cst_66 = arith.constant dense<0.000000e+00> : vector<1x16x128xf32>
    %61 = tpu.matmul %60, %0, %cst_66 {dimension_numbers = #tpu.dot_dimension_numbers<[2], [1], [1], [2], [0, 0, 0, 1, 1, 2], [0], [0]>} : vector<1x16x16xbf16>, vector<1x16x128xbf16>, vector<1x16x128xf32> -> vector<1x16x128xf32>
    %62 = arith.truncf %61 : vector<1x16x128xf32> to vector<1x16x128xbf16>
    %c1_67 = arith.constant 1 : index
    %c0_68 = arith.constant 0 : index
    %c0_69 = arith.constant 0 : index
    %63 = vector.load %arg4[%c1_67, %c0_68, %c0_69] : memref<3x16x16xbf16, #tpu.memory_space<vmem>>, vector<1x16x16xbf16>
    %64 = vector.shape_cast %63 : vector<1x16x16xbf16> to vector<16x16xbf16>
    %65 = vector.extract_strided_slice %62 {offsets = [0, 0, 0], sizes = [1, 16, 16], strides = [1, 1, 1]} : vector<1x16x128xbf16> to vector<1x16x16xbf16>
    %cst_70 = arith.constant dense<0.000000e+00> : vector<1x16x16xf32>
    %66 = tpu.matmul %65, %64, %cst_70 {dimension_numbers = #tpu.dot_dimension_numbers<[2], [0], [0, 1], [1], [0, 0, 0, 1, 1, 1], [], []>} : vector<1x16x16xbf16>, vector<16x16xbf16>, vector<1x16x16xf32> -> vector<1x16x16xf32>
    %c0_71 = arith.constant 0 : index
    %c0_72 = arith.constant 0 : index
    %c0_73 = arith.constant 0 : index
    %67 = vector.load %arg6[%c0_71, %c0_72, %c0_73] : memref<1x16x128xf32, #tpu.memory_space<vmem>>, vector<1x16x16xf32>
    %68 = arith.addf %67, %66 : vector<1x16x16xf32>
    %c0_74 = arith.constant 0 : index
    %c0_75 = arith.constant 0 : index
    %c0_76 = arith.constant 0 : index
    %69 = vector.load %arg6[%c0_74, %c0_75, %c0_76] : memref<1x16x128xf32, #tpu.memory_space<vmem>>, vector<1x16x16xf32>
    tpu.vector_store %arg6[%c0_74, %c0_75, %c0_76], %68 {strides = array<i32>} : memref<1x16x128xf32, #tpu.memory_space<vmem>>, vector<1x16x16xf32>,
    %70 = vector.extract_strided_slice %62 {offsets = [0, 0, 16], sizes = [1, 16, 16], strides = [1, 1, 1]} : vector<1x16x128xbf16> to vector<1x16x16xbf16>
    %cst_77 = arith.constant dense<0.000000e+00> : vector<1x16x16xf32>
    %71 = tpu.matmul %70, %64, %cst_77 {dimension_numbers = #tpu.dot_dimension_numbers<[2], [0], [0, 1], [1], [0, 0, 0, 1, 1, 1], [], []>} : vector<1x16x16xbf16>, vector<16x16xbf16>, vector<1x16x16xf32> -> vector<1x16x16xf32>
    %c0_78 = arith.constant 0 : index
    %c0_79 = arith.constant 0 : index
    %c16_80 = arith.constant 16 : index
    %72 = vector.load %arg6[%c0_78, %c0_79, %c16_80] : memref<1x16x128xf32, #tpu.memory_space<vmem>>, vector<1x16x16xf32>
    %73 = arith.addf %72, %71 : vector<1x16x16xf32>
    %c0_81 = arith.constant 0 : index
    %c0_82 = arith.constant 0 : index
    %c16_83 = arith.constant 16 : index
    %74 = vector.load %arg6[%c0_81, %c0_82, %c16_83] : memref<1x16x128xf32, #tpu.memory_space<vmem>>, vector<1x16x16xf32>
    tpu.vector_store %arg6[%c0_81, %c0_82, %c16_83], %73 {strides = array<i32>} : memref<1x16x128xf32, #tpu.memory_space<vmem>>, vector<1x16x16xf32>,
    %75 = vector.extract_strided_slice %62 {offsets = [0, 0, 32], sizes = [1, 16, 16], strides = [1, 1, 1]} : vector<1x16x128xbf16> to vector<1x16x16xbf16>
    %cst_84 = arith.constant dense<0.000000e+00> : vector<1x16x16xf32>
    %76 = tpu.matmul %75, %64, %cst_84 {dimension_numbers = #tpu.dot_dimension_numbers<[2], [0], [0, 1], [1], [0, 0, 0, 1, 1, 1], [], []>} : vector<1x16x16xbf16>, vector<16x16xbf16>, vector<1x16x16xf32> -> vector<1x16x16xf32>
    %c0_85 = arith.constant 0 : index
    %c0_86 = arith.constant 0 : index
    %c32_87 = arith.constant 32 : index
    %77 = vector.load %arg6[%c0_85, %c0_86, %c32_87] : memref<1x16x128xf32, #tpu.memory_space<vmem>>, vector<1x16x16xf32>
    %78 = arith.addf %77, %76 : vector<1x16x16xf32>
    %c0_88 = arith.constant 0 : index
    %c0_89 = arith.constant 0 : index
    %c32_90 = arith.constant 32 : index
    %79 = vector.load %arg6[%c0_88, %c0_89, %c32_90] : memref<1x16x128xf32, #tpu.memory_space<vmem>>, vector<1x16x16xf32>
    tpu.vector_store %arg6[%c0_88, %c0_89, %c32_90], %78 {strides = array<i32>} : memref<1x16x128xf32, #tpu.memory_space<vmem>>, vector<1x16x16xf32>,
    %80 = vector.extract_strided_slice %62 {offsets = [0, 0, 48], sizes = [1, 16, 16], strides = [1, 1, 1]} : vector<1x16x128xbf16> to vector<1x16x16xbf16>
    %cst_91 = arith.constant dense<0.000000e+00> : vector<1x16x16xf32>
    %81 = tpu.matmul %80, %64, %cst_91 {dimension_numbers = #tpu.dot_dimension_numbers<[2], [0], [0, 1], [1], [0, 0, 0, 1, 1, 1], [], []>} : vector<1x16x16xbf16>, vector<16x16xbf16>, vector<1x16x16xf32> -> vector<1x16x16xf32>
    %c0_92 = arith.constant 0 : index
    %c0_93 = arith.constant 0 : index
    %c48_94 = arith.constant 48 : index
    %82 = vector.load %arg6[%c0_92, %c0_93, %c48_94] : memref<1x16x128xf32, #tpu.memory_space<vmem>>, vector<1x16x16xf32>
    %83 = arith.addf %82, %81 : vector<1x16x16xf32>
    %c0_95 = arith.constant 0 : index
    %c0_96 = arith.constant 0 : index
    %c48_97 = arith.constant 48 : index
    %84 = vector.load %arg6[%c0_95, %c0_96, %c48_97] : memref<1x16x128xf32, #tpu.memory_space<vmem>>, vector<1x16x16xf32>
    tpu.vector_store %arg6[%c0_95, %c0_96, %c48_97], %83 {strides = array<i32>} : memref<1x16x128xf32, #tpu.memory_space<vmem>>, vector<1x16x16xf32>,
    %85 = vector.extract_strided_slice %62 {offsets = [0, 0, 64], sizes = [1, 16, 16], strides = [1, 1, 1]} : vector<1x16x128xbf16> to vector<1x16x16xbf16>
    %cst_98 = arith.constant dense<0.000000e+00> : vector<1x16x16xf32>
    %86 = tpu.matmul %85, %64, %cst_98 {dimension_numbers = #tpu.dot_dimension_numbers<[2], [0], [0, 1], [1], [0, 0, 0, 1, 1, 1], [], []>} : vector<1x16x16xbf16>, vector<16x16xbf16>, vector<1x16x16xf32> -> vector<1x16x16xf32>
    %c0_99 = arith.constant 0 : index
    %c0_100 = arith.constant 0 : index
    %c64_101 = arith.constant 64 : index
    %87 = vector.load %arg6[%c0_99, %c0_100, %c64_101] : memref<1x16x128xf32, #tpu.memory_space<vmem>>, vector<1x16x16xf32>
    %88 = arith.addf %87, %86 : vector<1x16x16xf32>
    %c0_102 = arith.constant 0 : index
    %c0_103 = arith.constant 0 : index
    %c64_104 = arith.constant 64 : index
    %89 = vector.load %arg6[%c0_102, %c0_103, %c64_104] : memref<1x16x128xf32, #tpu.memory_space<vmem>>, vector<1x16x16xf32>
    tpu.vector_store %arg6[%c0_102, %c0_103, %c64_104], %88 {strides = array<i32>} : memref<1x16x128xf32, #tpu.memory_space<vmem>>, vector<1x16x16xf32>,
    %90 = vector.extract_strided_slice %62 {offsets = [0, 0, 80], sizes = [1, 16, 16], strides = [1, 1, 1]} : vector<1x16x128xbf16> to vector<1x16x16xbf16>
    %cst_105 = arith.constant dense<0.000000e+00> : vector<1x16x16xf32>
    %91 = tpu.matmul %90, %64, %cst_105 {dimension_numbers = #tpu.dot_dimension_numbers<[2], [0], [0, 1], [1], [0, 0, 0, 1, 1, 1], [], []>} : vector<1x16x16xbf16>, vector<16x16xbf16>, vector<1x16x16xf32> -> vector<1x16x16xf32>
    %c0_106 = arith.constant 0 : index
    %c0_107 = arith.constant 0 : index
    %c80_108 = arith.constant 80 : index
    %92 = vector.load %arg6[%c0_106, %c0_107, %c80_108] : memref<1x16x128xf32, #tpu.memory_space<vmem>>, vector<1x16x16xf32>
    %93 = arith.addf %92, %91 : vector<1x16x16xf32>
    %c0_109 = arith.constant 0 : index
    %c0_110 = arith.constant 0 : index
    %c80_111 = arith.constant 80 : index
    %94 = vector.load %arg6[%c0_109, %c0_110, %c80_111] : memref<1x16x128xf32, #tpu.memory_space<vmem>>, vector<1x16x16xf32>
    tpu.vector_store %arg6[%c0_109, %c0_110, %c80_111], %93 {strides = array<i32>} : memref<1x16x128xf32, #tpu.memory_space<vmem>>, vector<1x16x16xf32>,
    %95 = vector.extract_strided_slice %62 {offsets = [0, 0, 96], sizes = [1, 16, 16], strides = [1, 1, 1]} : vector<1x16x128xbf16> to vector<1x16x16xbf16>
    %cst_112 = arith.constant dense<0.000000e+00> : vector<1x16x16xf32>
    %96 = tpu.matmul %95, %64, %cst_112 {dimension_numbers = #tpu.dot_dimension_numbers<[2], [0], [0, 1], [1], [0, 0, 0, 1, 1, 1], [], []>} : vector<1x16x16xbf16>, vector<16x16xbf16>, vector<1x16x16xf32> -> vector<1x16x16xf32>
    %c0_113 = arith.constant 0 : index
    %c0_114 = arith.constant 0 : index
    %c96_115 = arith.constant 96 : index
    %97 = vector.load %arg6[%c0_113, %c0_114, %c96_115] : memref<1x16x128xf32, #tpu.memory_space<vmem>>, vector<1x16x16xf32>
    %98 = arith.addf %97, %96 : vector<1x16x16xf32>
    %c0_116 = arith.constant 0 : index
    %c0_117 = arith.constant 0 : index
    %c96_118 = arith.constant 96 : index
    %99 = vector.load %arg6[%c0_116, %c0_117, %c96_118] : memref<1x16x128xf32, #tpu.memory_space<vmem>>, vector<1x16x16xf32>
    tpu.vector_store %arg6[%c0_116, %c0_117, %c96_118], %98 {strides = array<i32>} : memref<1x16x128xf32, #tpu.memory_space<vmem>>, vector<1x16x16xf32>,
    %100 = vector.extract_strided_slice %62 {offsets = [0, 0, 112], sizes = [1, 16, 16], strides = [1, 1, 1]} : vector<1x16x128xbf16> to vector<1x16x16xbf16>
    %cst_119 = arith.constant dense<0.000000e+00> : vector<1x16x16xf32>
    %101 = tpu.matmul %100, %64, %cst_119 {dimension_numbers = #tpu.dot_dimension_numbers<[2], [0], [0, 1], [1], [0, 0, 0, 1, 1, 1], [], []>} : vector<1x16x16xbf16>, vector<16x16xbf16>, vector<1x16x16xf32> -> vector<1x16x16xf32>
    %c0_120 = arith.constant 0 : index
    %c0_121 = arith.constant 0 : index
    %c112_122 = arith.constant 112 : index
    %102 = vector.load %arg6[%c0_120, %c0_121, %c112_122] : memref<1x16x128xf32, #tpu.memory_space<vmem>>, vector<1x16x16xf32>
    %103 = arith.addf %102, %101 : vector<1x16x16xf32>
    %c0_123 = arith.constant 0 : index
    %c0_124 = arith.constant 0 : index
    %c112_125 = arith.constant 112 : index
    %104 = vector.load %arg6[%c0_123, %c0_124, %c112_125] : memref<1x16x128xf32, #tpu.memory_space<vmem>>, vector<1x16x16xf32>
    tpu.vector_store %arg6[%c0_123, %c0_124, %c112_125], %103 {strides = array<i32>} : memref<1x16x128xf32, #tpu.memory_space<vmem>>, vector<1x16x16xf32>,
    %c2 = arith.constant 2 : index
    %c0_126 = arith.constant 0 : index
    %c0_127 = arith.constant 0 : index
    %105 = vector.load %arg3[%c2, %c0_126, %c0_127] : memref<3x16x16xbf16, #tpu.memory_space<vmem>>, vector<1x16x16xbf16>
    %106 = vector.shape_cast %105 : vector<1x16x16xbf16> to vector<16x16xbf16>
    %107 = arith.extf %106 : vector<16x16xbf16> to vector<16x16xf32>
    %108 = vector.shape_cast %107 : vector<16x16xf32> to vector<1x16x16xf32>
    %109 = arith.mulf %108, %2 : vector<1x16x16xf32>
    %110 = arith.truncf %109 : vector<1x16x16xf32> to vector<1x16x16xbf16>
    %cst_128 = arith.constant dense<0.000000e+00> : vector<1x16x128xf32>
    %111 = tpu.matmul %110, %0, %cst_128 {dimension_numbers = #tpu.dot_dimension_numbers<[2], [1], [1], [2], [0, 0, 0, 1, 1, 2], [0], [0]>} : vector<1x16x16xbf16>, vector<1x16x128xbf16>, vector<1x16x128xf32> -> vector<1x16x128xf32>
    %112 = arith.truncf %111 : vector<1x16x128xf32> to vector<1x16x128xbf16>
    %c2_129 = arith.constant 2 : index
    %c0_130 = arith.constant 0 : index
    %c0_131 = arith.constant 0 : index
    %113 = vector.load %arg4[%c2_129, %c0_130, %c0_131] : memref<3x16x16xbf16, #tpu.memory_space<vmem>>, vector<1x16x16xbf16>
    %114 = vector.shape_cast %113 : vector<1x16x16xbf16> to vector<16x16xbf16>
    %115 = vector.extract_strided_slice %112 {offsets = [0, 0, 0], sizes = [1, 16, 16], strides = [1, 1, 1]} : vector<1x16x128xbf16> to vector<1x16x16xbf16>
    %cst_132 = arith.constant dense<0.000000e+00> : vector<1x16x16xf32>
    %116 = tpu.matmul %115, %114, %cst_132 {dimension_numbers = #tpu.dot_dimension_numbers<[2], [0], [0, 1], [1], [0, 0, 0, 1, 1, 1], [], []>} : vector<1x16x16xbf16>, vector<16x16xbf16>, vector<1x16x16xf32> -> vector<1x16x16xf32>
    %c0_133 = arith.constant 0 : index
    %c0_134 = arith.constant 0 : index
    %c0_135 = arith.constant 0 : index
    %117 = vector.load %arg6[%c0_133, %c0_134, %c0_135] : memref<1x16x128xf32, #tpu.memory_space<vmem>>, vector<1x16x16xf32>
    %118 = arith.addf %117, %116 : vector<1x16x16xf32>
    %c0_136 = arith.constant 0 : index
    %c0_137 = arith.constant 0 : index
    %c0_138 = arith.constant 0 : index
    %119 = vector.load %arg6[%c0_136, %c0_137, %c0_138] : memref<1x16x128xf32, #tpu.memory_space<vmem>>, vector<1x16x16xf32>
    tpu.vector_store %arg6[%c0_136, %c0_137, %c0_138], %118 {strides = array<i32>} : memref<1x16x128xf32, #tpu.memory_space<vmem>>, vector<1x16x16xf32>,
    %120 = vector.extract_strided_slice %112 {offsets = [0, 0, 16], sizes = [1, 16, 16], strides = [1, 1, 1]} : vector<1x16x128xbf16> to vector<1x16x16xbf16>
    %cst_139 = arith.constant dense<0.000000e+00> : vector<1x16x16xf32>
    %121 = tpu.matmul %120, %114, %cst_139 {dimension_numbers = #tpu.dot_dimension_numbers<[2], [0], [0, 1], [1], [0, 0, 0, 1, 1, 1], [], []>} : vector<1x16x16xbf16>, vector<16x16xbf16>, vector<1x16x16xf32> -> vector<1x16x16xf32>
    %c0_140 = arith.constant 0 : index
    %c0_141 = arith.constant 0 : index
    %c16_142 = arith.constant 16 : index
    %122 = vector.load %arg6[%c0_140, %c0_141, %c16_142] : memref<1x16x128xf32, #tpu.memory_space<vmem>>, vector<1x16x16xf32>
    %123 = arith.addf %122, %121 : vector<1x16x16xf32>
    %c0_143 = arith.constant 0 : index
    %c0_144 = arith.constant 0 : index
    %c16_145 = arith.constant 16 : index
    %124 = vector.load %arg6[%c0_143, %c0_144, %c16_145] : memref<1x16x128xf32, #tpu.memory_space<vmem>>, vector<1x16x16xf32>
    tpu.vector_store %arg6[%c0_143, %c0_144, %c16_145], %123 {strides = array<i32>} : memref<1x16x128xf32, #tpu.memory_space<vmem>>, vector<1x16x16xf32>,
    %125 = vector.extract_strided_slice %112 {offsets = [0, 0, 32], sizes = [1, 16, 16], strides = [1, 1, 1]} : vector<1x16x128xbf16> to vector<1x16x16xbf16>
    %cst_146 = arith.constant dense<0.000000e+00> : vector<1x16x16xf32>
    %126 = tpu.matmul %125, %114, %cst_146 {dimension_numbers = #tpu.dot_dimension_numbers<[2], [0], [0, 1], [1], [0, 0, 0, 1, 1, 1], [], []>} : vector<1x16x16xbf16>, vector<16x16xbf16>, vector<1x16x16xf32> -> vector<1x16x16xf32>
    %c0_147 = arith.constant 0 : index
    %c0_148 = arith.constant 0 : index
    %c32_149 = arith.constant 32 : index
    %127 = vector.load %arg6[%c0_147, %c0_148, %c32_149] : memref<1x16x128xf32, #tpu.memory_space<vmem>>, vector<1x16x16xf32>
    %128 = arith.addf %127, %126 : vector<1x16x16xf32>
    %c0_150 = arith.constant 0 : index
    %c0_151 = arith.constant 0 : index
    %c32_152 = arith.constant 32 : index
    %129 = vector.load %arg6[%c0_150, %c0_151, %c32_152] : memref<1x16x128xf32, #tpu.memory_space<vmem>>, vector<1x16x16xf32>
    tpu.vector_store %arg6[%c0_150, %c0_151, %c32_152], %128 {strides = array<i32>} : memref<1x16x128xf32, #tpu.memory_space<vmem>>, vector<1x16x16xf32>,
    %130 = vector.extract_strided_slice %112 {offsets = [0, 0, 48], sizes = [1, 16, 16], strides = [1, 1, 1]} : vector<1x16x128xbf16> to vector<1x16x16xbf16>
    %cst_153 = arith.constant dense<0.000000e+00> : vector<1x16x16xf32>
    %131 = tpu.matmul %130, %114, %cst_153 {dimension_numbers = #tpu.dot_dimension_numbers<[2], [0], [0, 1], [1], [0, 0, 0, 1, 1, 1], [], []>} : vector<1x16x16xbf16>, vector<16x16xbf16>, vector<1x16x16xf32> -> vector<1x16x16xf32>
    %c0_154 = arith.constant 0 : index
    %c0_155 = arith.constant 0 : index
    %c48_156 = arith.constant 48 : index
    %132 = vector.load %arg6[%c0_154, %c0_155, %c48_156] : memref<1x16x128xf32, #tpu.memory_space<vmem>>, vector<1x16x16xf32>
    %133 = arith.addf %132, %131 : vector<1x16x16xf32>
    %c0_157 = arith.constant 0 : index
    %c0_158 = arith.constant 0 : index
    %c48_159 = arith.constant 48 : index
    %134 = vector.load %arg6[%c0_157, %c0_158, %c48_159] : memref<1x16x128xf32, #tpu.memory_space<vmem>>, vector<1x16x16xf32>
    tpu.vector_store %arg6[%c0_157, %c0_158, %c48_159], %133 {strides = array<i32>} : memref<1x16x128xf32, #tpu.memory_space<vmem>>, vector<1x16x16xf32>,
    %135 = vector.extract_strided_slice %112 {offsets = [0, 0, 64], sizes = [1, 16, 16], strides = [1, 1, 1]} : vector<1x16x128xbf16> to vector<1x16x16xbf16>
    %cst_160 = arith.constant dense<0.000000e+00> : vector<1x16x16xf32>
    %136 = tpu.matmul %135, %114, %cst_160 {dimension_numbers = #tpu.dot_dimension_numbers<[2], [0], [0, 1], [1], [0, 0, 0, 1, 1, 1], [], []>} : vector<1x16x16xbf16>, vector<16x16xbf16>, vector<1x16x16xf32> -> vector<1x16x16xf32>
    %c0_161 = arith.constant 0 : index
    %c0_162 = arith.constant 0 : index
    %c64_163 = arith.constant 64 : index
    %137 = vector.load %arg6[%c0_161, %c0_162, %c64_163] : memref<1x16x128xf32, #tpu.memory_space<vmem>>, vector<1x16x16xf32>
    %138 = arith.addf %137, %136 : vector<1x16x16xf32>
    %c0_164 = arith.constant 0 : index
    %c0_165 = arith.constant 0 : index
    %c64_166 = arith.constant 64 : index
    %139 = vector.load %arg6[%c0_164, %c0_165, %c64_166] : memref<1x16x128xf32, #tpu.memory_space<vmem>>, vector<1x16x16xf32>
    tpu.vector_store %arg6[%c0_164, %c0_165, %c64_166], %138 {strides = array<i32>} : memref<1x16x128xf32, #tpu.memory_space<vmem>>, vector<1x16x16xf32>,
    %140 = vector.extract_strided_slice %112 {offsets = [0, 0, 80], sizes = [1, 16, 16], strides = [1, 1, 1]} : vector<1x16x128xbf16> to vector<1x16x16xbf16>
    %cst_167 = arith.constant dense<0.000000e+00> : vector<1x16x16xf32>
    %141 = tpu.matmul %140, %114, %cst_167 {dimension_numbers = #tpu.dot_dimension_numbers<[2], [0], [0, 1], [1], [0, 0, 0, 1, 1, 1], [], []>} : vector<1x16x16xbf16>, vector<16x16xbf16>, vector<1x16x16xf32> -> vector<1x16x16xf32>
    %c0_168 = arith.constant 0 : index
    %c0_169 = arith.constant 0 : index
    %c80_170 = arith.constant 80 : index
    %142 = vector.load %arg6[%c0_168, %c0_169, %c80_170] : memref<1x16x128xf32, #tpu.memory_space<vmem>>, vector<1x16x16xf32>
    %143 = arith.addf %142, %141 : vector<1x16x16xf32>
    %c0_171 = arith.constant 0 : index
    %c0_172 = arith.constant 0 : index
    %c80_173 = arith.constant 80 : index
    %144 = vector.load %arg6[%c0_171, %c0_172, %c80_173] : memref<1x16x128xf32, #tpu.memory_space<vmem>>, vector<1x16x16xf32>
    tpu.vector_store %arg6[%c0_171, %c0_172, %c80_173], %143 {strides = array<i32>} : memref<1x16x128xf32, #tpu.memory_space<vmem>>, vector<1x16x16xf32>,
    %145 = vector.extract_strided_slice %112 {offsets = [0, 0, 96], sizes = [1, 16, 16], strides = [1, 1, 1]} : vector<1x16x128xbf16> to vector<1x16x16xbf16>
    %cst_174 = arith.constant dense<0.000000e+00> : vector<1x16x16xf32>
    %146 = tpu.matmul %145, %114, %cst_174 {dimension_numbers = #tpu.dot_dimension_numbers<[2], [0], [0, 1], [1], [0, 0, 0, 1, 1, 1], [], []>} : vector<1x16x16xbf16>, vector<16x16xbf16>, vector<1x16x16xf32> -> vector<1x16x16xf32>
    %c0_175 = arith.constant 0 : index
    %c0_176 = arith.constant 0 : index
    %c96_177 = arith.constant 96 : index
    %147 = vector.load %arg6[%c0_175, %c0_176, %c96_177] : memref<1x16x128xf32, #tpu.memory_space<vmem>>, vector<1x16x16xf32>
    %148 = arith.addf %147, %146 : vector<1x16x16xf32>
    %c0_178 = arith.constant 0 : index
    %c0_179 = arith.constant 0 : index
    %c96_180 = arith.constant 96 : index
    %149 = vector.load %arg6[%c0_178, %c0_179, %c96_180] : memref<1x16x128xf32, #tpu.memory_space<vmem>>, vector<1x16x16xf32>
    tpu.vector_store %arg6[%c0_178, %c0_179, %c96_180], %148 {strides = array<i32>} : memref<1x16x128xf32, #tpu.memory_space<vmem>>, vector<1x16x16xf32>,
    %150 = vector.extract_strided_slice %112 {offsets = [0, 0, 112], sizes = [1, 16, 16], strides = [1, 1, 1]} : vector<1x16x128xbf16> to vector<1x16x16xbf16>
    %cst_181 = arith.constant dense<0.000000e+00> : vector<1x16x16xf32>
    %151 = tpu.matmul %150, %114, %cst_181 {dimension_numbers = #tpu.dot_dimension_numbers<[2], [0], [0, 1], [1], [0, 0, 0, 1, 1, 1], [], []>} : vector<1x16x16xbf16>, vector<16x16xbf16>, vector<1x16x16xf32> -> vector<1x16x16xf32>
    %c0_182 = arith.constant 0 : index
    %c0_183 = arith.constant 0 : index
    %c112_184 = arith.constant 112 : index
    %152 = vector.load %arg6[%c0_182, %c0_183, %c112_184] : memref<1x16x128xf32, #tpu.memory_space<vmem>>, vector<1x16x16xf32>
    %153 = arith.addf %152, %151 : vector<1x16x16xf32>
    %c0_185 = arith.constant 0 : index
    %c0_186 = arith.constant 0 : index
    %c112_187 = arith.constant 112 : index
    %154 = vector.load %arg6[%c0_185, %c0_186, %c112_187] : memref<1x16x128xf32, #tpu.memory_space<vmem>>, vector<1x16x16xf32>
    tpu.vector_store %arg6[%c0_185, %c0_186, %c112_187], %153 {strides = array<i32>} : memref<1x16x128xf32, #tpu.memory_space<vmem>>, vector<1x16x16xf32>,
    %c0_188 = arith.constant 0 : index
    %c0_189 = arith.constant 0 : index
    %c0_190 = arith.constant 0 : index
    %155 = vector.load %arg6[%c0_188, %c0_189, %c0_190] : memref<1x16x128xf32, #tpu.memory_space<vmem>>, vector<1x16x128xf32>
    %cst_191 = arith.constant 0.000000e+00 : f32
    %156 = vector.broadcast %cst_191 : f32 to vector<1x16x128xf32>
    %157 = arith.maximumf %155, %156 : vector<1x16x128xf32>
    %c0_192 = arith.constant 0 : index
    %c0_193 = arith.constant 0 : index
    %c0_194 = arith.constant 0 : index
    %158 = vector.load %arg5[%c0_192, %c0_193, %c0_194] : memref<1x16x128xf32, #tpu.memory_space<vmem>>, vector<1x16x128xf32>
    tpu.vector_store %arg5[%c0_192, %c0_193, %c0_194], %157 {strides = array<i32>} : memref<1x16x128xf32, #tpu.memory_space<vmem>>, vector<1x16x128xf32>,
    return
  }
  func.func @transform_0(%arg0: i32) -> (i32, i32, i32) {
    %c0_i32 = arith.constant 0 : i32
    %c0_i32_0 = arith.constant 0 : i32
    %c0_i32_1 = arith.constant 0 : i32
    return %arg0, %c0_i32, %c0_i32_0 : i32, i32, i32
  }
  func.func @transform_1(%arg0: i32) -> (i32, i32, i32) {
    %c0_i32 = arith.constant 0 : i32
    %c0_i32_0 = arith.constant 0 : i32
    %c0_i32_1 = arith.constant 0 : i32
    return %arg0, %c0_i32, %c0_i32_0 : i32, i32, i32
  }
  func.func @transform_2(%arg0: i32) -> (i32, i32, i32) {
    %c0_i32 = arith.constant 0 : i32
    %c0_i32_0 = arith.constant 0 : i32
    %c0_i32_1 = arith.constant 0 : i32
    %c0_i32_2 = arith.constant 0 : i32
    return %c0_i32, %c0_i32_0, %c0_i32_1 : i32, i32, i32
  }
  func.func @transform_3(%arg0: i32) -> (i32, i32, i32) {
    %c0_i32 = arith.constant 0 : i32
    %c0_i32_0 = arith.constant 0 : i32
    %c0_i32_1 = arith.constant 0 : i32
    %c0_i32_2 = arith.constant 0 : i32
    return %c0_i32, %c0_i32_0, %c0_i32_1 : i32, i32, i32
  }
  func.func @transform_4(%arg0: i32) -> (i32, i32, i32) {
    %c0_i32 = arith.constant 0 : i32
    %c0_i32_0 = arith.constant 0 : i32
    %c0_i32_1 = arith.constant 0 : i32
    return %arg0, %c0_i32, %c0_i32_0 : i32, i32, i32
  }
}

</mosaic_0001>

<llo_original>
// kernel: tpu_custom_call.1
$region0: #{tpu_custom_call.1}
  #allocation0 [shape = 'u32[]', space=smem, size = 0x4, offset = 0x4, fixed_abs, tag = 'smem constant byte address 0x4 - core index']
  #allocation1 [shape = 'u32[72,128]{1,0:T(1,128)}', space=vmem, size = 0x9000, scoped, tag = 'internal scratch']
  #allocation2 [shape = 'f32[1,16,128]{2,1,0:T(8,128)}', space=vmem, size = 0x2000, scoped, tag = 'scratch operand']
  %s0 = inlined_call_operand.hbm [shape: bf16[2,16,128], index: 0, kind: input, shape index: {}]
  %s1 = inlined_call_operand.hbm [shape: bf16[2,16,16], index: 1, kind: input, shape index: {}]
  %s2 = inlined_call_operand.hbm [shape: bf16[3,16,16], index: 2, kind: input, shape index: {}]
  %s3 = inlined_call_operand.hbm [shape: bf16[3,16,16], index: 3, kind: input, shape index: {}]
  %s4 = inlined_call_operand.hbm [shape: f32[2,16,128], index: 4, kind: output, shape index: {}]
  %s5 = sld [smem:[#allocation0]]
  $region65: #{tpu_custom_call.1} parent=0
    _
  %s7 = ssub.s32 1, %s5
  %s8 = scalar_select 0, %s7, %s5
  $region1: #{tpu_custom_call.1} parent=0
    #allocation3 [shape = 'u8[8192]{0}', space=vmem, size = 0x2000, scoped, tag = 'input window, operand 0']
    #allocation4 [shape = 's32[2]{0}', space=sflag, size = 0x8, scoped, tag = 'scoped memory for tpu_custom_call.1']
    #allocation5 [shape = 's32[2]{0}', space=sflag, size = 0x8, scoped, tag = 'scoped memory for tpu_custom_call.1']
    #allocation6 [shape = 'u8[8192]{0}', space=vmem, size = 0x2000, scoped, tag = 'input window, operand 1']
    #allocation7 [shape = 's32[2]{0}', space=sflag, size = 0x8, scoped, tag = 'scoped memory for tpu_custom_call.1']
    #allocation8 [shape = 'u8[12288]{0}', space=vmem, size = 0x3000, scoped, tag = 'input window, operand 2, single buffered']
    #allocation9 [shape = 'u8[12288]{0}', space=vmem, size = 0x3000, scoped, tag = 'input window, operand 3, single buffered']
    #allocation10 [shape = 's32[1]{0}', space=sflag, size = 0x4, scoped, tag = 'scoped memory for tpu_custom_call.1']
    #allocation11 [shape = 'u8[16384]{0}', space=vmem, size = 0x4000, scoped, tag = 'output window, operand 0']
    %9 = vsyncpa [#allocation4], 0
    %s10 = scalar_lea.sflag [#allocation4], 1
    %11 = vsyncpa %s10, 0
    %12 = vsyncpa [#allocation7], 0
    %s13 = scalar_lea.sflag [#allocation7], 1
    %14 = vsyncpa %s13, 0
    %15 = vsyncpa [#allocation10], 0
    %16 = vsyncpa [#allocation5], 0
    %s17 = scalar_lea.sflag [#allocation5], 1
    %18 = vsyncpa %s17, 0
    loop: start=0, step=1, limit=4
    $region2: #{tpu_custom_call.1} parent=1 // loop_pre_header
      _
    $region3: #{tpu_custom_call.1} parent=1 // loop_header
      %s20 = sphi 0, %s24
      %p21 = scmp.ge.s32.totalorder %s20, 4
      %s30 = sphi 0, %s32
      %s33 = sphi 0, %s30
      %s34 = sphi 0, %s33
      %s50 = sphi 0, %s34
      %s56 = sphi 0, %s58
      %s59 = sphi 0, %s56
      %s60 = sphi 0, %s59
      %s76 = sphi 0, %s60
      %s80 = sphi 0, %s80
      %s82 = sphi 0, %s80
      %s83 = sphi 0, %s82
      %s97 = sphi 0, %s83
      %s101 = sphi 0, %s101
      %s103 = sphi 0, %s101
      %s104 = sphi 0, %s103
      %s118 = sphi 0, %s104
      %s124 = sphi 0, %s126
      %s127 = sphi 0, %s124
      %s128 = sphi 0, %s127
      %s144 = sphi 0, %s128
    $region4: #{tpu_custom_call.1} parent=1 // loop_header_branch
      %23 = sbr.rel (%p21) target = $region8
    $region5: #{tpu_custom_call.1} parent=1 // loop_body
      %s25 = ssub.s32 %s20, 1
      %s26 = ssub.s32 %s20, 2
      %s27 = sadd.s32 %s20, 1
      %s28 = ssub.s32 %s20, %s27
      %p29 = scmp.eq.s32.totalorder %s28, 0
      %s31 = sadd.s32 %s30, 1
      %s32 = scalar_select %p29, %s30, %s31
      %p35 = pneg %p29
      %p36 = scmp.eq.s32.totalorder %s20, 1
      %p37 = por %p35, %p36
      %p38 = scmp.ne.s32.totalorder %s30, %s33
      %p39 = scmp.eq.s32.totalorder %s20, 0
      %p40 = por %p38, %p39
      %p41 = scmp.ne.s32.totalorder %s30, %s33
      %p42 = scmp.eq.s32.totalorder %s25, 1
      %p43 = por %p41, %p42
      %p44 = scmp.ne.s32.totalorder %s33, %s34
      %p45 = scmp.eq.s32.totalorder %s25, 0
      %p46 = por %p44, %p45
      %p47 = scmp.ne.s32.totalorder %s33, %s34
      %p48 = scmp.eq.s32.totalorder %s26, 1
      %p49 = por %p47, %p48
      %p51 = scmp.ne.s32.totalorder %s34, %s50
      %p52 = scmp.eq.s32.totalorder %s26, 0
      %p53 = por %p51, %p52
      %s54 = ssub.s32 %s20, %s27
      %p55 = scmp.eq.s32.totalorder %s54, 0
      %s57 = sadd.s32 %s56, 1
      %s58 = scalar_select %p55, %s56, %s57
      %p61 = pneg %p55
      %p62 = scmp.eq.s32.totalorder %s20, 1
      %p63 = por %p61, %p62
      %p64 = scmp.ne.s32.totalorder %s56, %s59
      %p65 = scmp.eq.s32.totalorder %s20, 0
      %p66 = por %p64, %p65
      %p67 = scmp.ne.s32.totalorder %s56, %s59
      %p68 = scmp.eq.s32.totalorder %s25, 1
      %p69 = por %p67, %p68
      %p70 = scmp.ne.s32.totalorder %s59, %s60
      %p71 = scmp.eq.s32.totalorder %s25, 0
      %p72 = por %p70, %p71
      %p73 = scmp.ne.s32.totalorder %s59, %s60
      %p74 = scmp.eq.s32.totalorder %s26, 1
      %p75 = por %p73, %p74
      %p77 = scmp.ne.s32.totalorder %s60, %s76
      %p78 = scmp.eq.s32.totalorder %s26, 0
      %p79 = por %p77, %p78
      %s81 = sadd.s32 %s80, 1
      %p84 = scmp.eq.s32.totalorder %s20, 1
      %p85 = scmp.ne.s32.totalorder %s80, %s82
      %p86 = scmp.eq.s32.totalorder %s20, 0
      %p87 = por %p85, %p86
      %p88 = scmp.ne.s32.totalorder %s80, %s82
      %p89 = scmp.eq.s32.totalorder %s25, 1
      %p90 = por %p88, %p89
      %p91 = scmp.ne.s32.totalorder %s82, %s83
      %p92 = scmp.eq.s32.totalorder %s25, 0
      %p93 = por %p91, %p92
      %p94 = scmp.ne.s32.totalorder %s82, %s83
      %p95 = scmp.eq.s32.totalorder %s26, 1
      %p96 = por %p94, %p95
      %p98 = scmp.ne.s32.totalorder %s83, %s97
      %p99 = scmp.eq.s32.totalorder %s26, 0
      %p100 = por %p98, %p99
      %s102 = sadd.s32 %s101, 1
      %p105 = scmp.eq.s32.totalorder %s20, 1
      %p106 = scmp.ne.s32.totalorder %s101, %s103
      %p107 = scmp.eq.s32.totalorder %s20, 0
      %p108 = por %p106, %p107
      %p109 = scmp.ne.s32.totalorder %s101, %s103
      %p110 = scmp.eq.s32.totalorder %s25, 1
      %p111 = por %p109, %p110
      %p112 = scmp.ne.s32.totalorder %s103, %s104
      %p113 = scmp.eq.s32.totalorder %s25, 0
      %p114 = por %p112, %p113
      %p115 = scmp.ne.s32.totalorder %s103, %s104
      %p116 = scmp.eq.s32.totalorder %s26, 1
      %p117 = por %p115, %p116
      %p119 = scmp.ne.s32.totalorder %s104, %s118
      %p120 = scmp.eq.s32.totalorder %s26, 0
      %p121 = por %p119, %p120
      %s122 = ssub.s32 %s20, %s27
      %p123 = scmp.eq.s32.totalorder %s122, 0
      %s125 = sadd.s32 %s124, 1
      %s126 = scalar_select %p123, %s124, %s125
      %p129 = pneg %p123
      %p130 = scmp.eq.s32.totalorder %s20, 1
      %p131 = por %p129, %p130
      %p132 = scmp.ne.s32.totalorder %s124, %s127
      %p133 = scmp.eq.s32.totalorder %s20, 0
      %p134 = por %p132, %p133
      %p135 = scmp.ne.s32.totalorder %s124, %s127
      %p136 = scmp.eq.s32.totalorder %s25, 1
      %p137 = por %p135, %p136
      %p138 = scmp.ne.s32.totalorder %s127, %s128
      %p139 = scmp.eq.s32.totalorder %s25, 0
      %p140 = por %p138, %p139
      %p141 = scmp.ne.s32.totalorder %s127, %s128
      %p142 = scmp.eq.s32.totalorder %s26, 1
      %p143 = por %p141, %p142
      %p145 = scmp.ne.s32.totalorder %s128, %s144
      %p146 = scmp.eq.s32.totalorder %s26, 0
      %p147 = por %p145, %p146
      %p148 = scmp.le.s32.totalorder 1, %s20
      %p149 = scmp.lt.s32.totalorder %s20, 3
      %p150 = pnand %p148, %p149
      %p151 = pneg %p150
      // Predicated region
      $region9: #{tpu_custom_call.1} parent=5 // pred_check
        _
      $region10: #{tpu_custom_call.1} parent=5 // pred_check_branch
        %153 = sbr.rel (%p150) target = $region12
      $region11: #{tpu_custom_call.1} parent=5 // pred_region
        %s154 = ssub.s32 %s20, 1
        // Predicated region
        $region13: #{tpu_custom_call.1} parent=11 // pred_check
          %p155 = pneg %p93
        $region14: #{tpu_custom_call.1} parent=11 // pred_check_branch
          %157 = sbr.rel (%p155) target = $region16
        $region15: #{tpu_custom_call.1} parent=11 // pred_region
          %159 = vsyncadd [#allocation7], 0
          %s160 = sshll.u32 %s2, 4
          %s161 = int_to_ptr.hbm [resolvable:$true] %s160
          %s162 = sshll.u32 [#allocation8], 4
          %s163 = int_to_ptr.vmem [resolvable:$true] %s162
          %168 = dma.hbm_to_vmem [thread:$0]  %s161, 384, %s163, [#allocation7], 64, 64, 4
        $region16: #{tpu_custom_call.1} parent=11 // pred_fallthru
          _
        // Predicated region
        $region17: #{tpu_custom_call.1} parent=11 // pred_check
          %p169 = pneg %p114
        $region18: #{tpu_custom_call.1} parent=11 // pred_check_branch
          %171 = sbr.rel (%p169) target = $region20
        $region19: #{tpu_custom_call.1} parent=11 // pred_region
          %173 = vsyncadd [#allocation10], 0
          %s174 = sshll.u32 %s3, 4
          %s175 = int_to_ptr.hbm [resolvable:$true] %s174
          %s176 = sshll.u32 [#allocation9], 4
          %s177 = int_to_ptr.vmem [resolvable:$true] %s176
          %182 = dma.hbm_to_vmem [thread:$0]  %s175, 384, %s177, [#allocation10], 64, 64, 4
        $region20: #{tpu_custom_call.1} parent=11 // pred_fallthru
          _
      $region12: #{tpu_custom_call.1} parent=5 // pred_fallthru
        _
      %p183 = scmp.lt.s32.totalorder %s20, 2
      // Predicated region
      $region21: #{tpu_custom_call.1} parent=5 // pred_check
        %p184 = pneg %p183
      $region22: #{tpu_custom_call.1} parent=5 // pred_check_branch
        %186 = sbr.rel (%p184) target = $region24
      $region23: #{tpu_custom_call.1} parent=5 // pred_region
        // Predicated region
        $region25: #{tpu_custom_call.1} parent=23 // pred_check
          %p187 = pneg %p40
        $region26: #{tpu_custom_call.1} parent=23 // pred_check_branch
          %189 = sbr.rel (%p187) target = $region28
        $region27: #{tpu_custom_call.1} parent=23 // pred_region
          %s190 = sand.u32 %s30, 1
          %s191 = scalar_lea.sflag [#allocation4], %s190
          %s192 = sand.u32 %s30, 1
          %s193 = smul.addr %s192, 8
          %s194 = scalar_lea.vmem [#allocation3], %s193
          %196 = vsyncadd %s191, 0
          %s197 = smul.addr %s20, 2
          %s198 = smul.addr %s197, 4
          %s199 = scalar_lea.hbm %s0, %s198
          %s200 = sshll.u32 %s199, 4
          %s201 = int_to_ptr.hbm [resolvable:$true] %s200
          %s202 = sshll.u32 %s194, 4
          %s203 = int_to_ptr.vmem [resolvable:$true] %s202
          %208 = dma.hbm_to_vmem [thread:$0]  %s201, 128, %s203, %s191, 64, 64, 4
        $region28: #{tpu_custom_call.1} parent=23 // pred_fallthru
          _
        // Predicated region
        $region29: #{tpu_custom_call.1} parent=23 // pred_check
          %p209 = pneg %p66
        $region30: #{tpu_custom_call.1} parent=23 // pred_check_branch
          %211 = sbr.rel (%p209) target = $region32
        $region31: #{tpu_custom_call.1} parent=23 // pred_region
          %s212 = sand.u32 %s20, 1
          %s213 = scalar_lea.sflag [#allocation7], %s212
          %s214 = sand.u32 %s56, 1
          %s215 = smul.addr %s214, 8
          %s216 = scalar_lea.vmem [#allocation6], %s215
          %218 = vsyncadd %s213, 0
          %s219 = smul.addr %s20, 2
          %s220 = smul.addr %s219, 4
          %s221 = scalar_lea.hbm %s1, %s220
          %s222 = sshll.u32 %s221, 4
          %s223 = int_to_ptr.hbm [resolvable:$true] %s222
          %s224 = sshll.u32 %s216, 4
          %s225 = int_to_ptr.vmem [resolvable:$true] %s224
          %230 = dma.hbm_to_vmem [thread:$0]  %s223, 128, %s225, %s213, 64, 64, 4
        $region32: #{tpu_custom_call.1} parent=23 // pred_fallthru
          _
      $region24: #{tpu_custom_call.1} parent=5 // pred_fallthru
        _
      %p231 = scmp.le.s32.totalorder 1, %s20
      %p232 = scmp.lt.s32.totalorder %s20, 3
      %p233 = pnand %p231, %p232
      %p234 = pneg %p233
      // Predicated region
      $region33: #{tpu_custom_call.1} parent=5 // pred_check
        _
      $region34: #{tpu_custom_call.1} parent=5 // pred_check_branch
        %236 = sbr.rel (%p233) target = $region36
      $region35: #{tpu_custom_call.1} parent=5 // pred_region
        %s237 = ssub.s32 %s20, 1
        %s238 = sand.u32 %s33, 1
        %s239 = scalar_lea.sflag [#allocation4], %s238
        %s240 = sand.u32 %s33, 1
        %s241 = smul.addr %s240, 8
        %s242 = scalar_lea.vmem [#allocation3], %s241
        // Predicated region
        $region37: #{tpu_custom_call.1} parent=35 // pred_check
          %p243 = pneg %p46
        $region38: #{tpu_custom_call.1} parent=35 // pred_check_branch
          %245 = sbr.rel (%p243) target = $region40
        $region39: #{tpu_custom_call.1} parent=35 // pred_region
          %247 = dma.done %s239, 128
        $region40: #{tpu_custom_call.1} parent=35 // pred_fallthru
          _
        %s248 = sand.u32 %s25, 1
        %s249 = scalar_lea.sflag [#allocation7], %s248
        %s250 = sand.u32 %s59, 1
        %s251 = smul.addr %s250, 8
        %s252 = scalar_lea.vmem [#allocation6], %s251
        // Predicated region
        $region41: #{tpu_custom_call.1} parent=35 // pred_check
          %p253 = pneg %p72
        $region42: #{tpu_custom_call.1} parent=35 // pred_check_branch
          %255 = sbr.rel (%p253) target = $region44
        $region43: #{tpu_custom_call.1} parent=35 // pred_region
          %257 = dma.done %s249, 128
        $region44: #{tpu_custom_call.1} parent=35 // pred_fallthru
          _
        // Predicated region
        $region45: #{tpu_custom_call.1} parent=35 // pred_check
          %p258 = pneg %p93
        $region46: #{tpu_custom_call.1} parent=35 // pred_check_branch
          %260 = sbr.rel (%p258) target = $region48
        $region47: #{tpu_custom_call.1} parent=35 // pred_region
          %262 = dma.done [#allocation7], 384
        $region48: #{tpu_custom_call.1} parent=35 // pred_fallthru
          _
        // Predicated region
        $region49: #{tpu_custom_call.1} parent=35 // pred_check
          %p263 = pneg %p114
        $region50: #{tpu_custom_call.1} parent=35 // pred_check_branch
          %265 = sbr.rel (%p263) target = $region52
        $region51: #{tpu_custom_call.1} parent=35 // pred_region
          %267 = dma.done [#allocation10], 384
        $region52: #{tpu_custom_call.1} parent=35 // pred_fallthru
          _
        %s268 = sand.u32 %s33, 1
        %s269 = scalar_lea.sflag [#allocation4], %s268
        %s270 = sand.u32 %s33, 1
        %s271 = smul.addr %s270, 8
        %s272 = scalar_lea.vmem [#allocation3], %s271
        %p273 = pneg %p46
        %p274 = pneg %p43
        %s275 = sand.u32 %s25, 1
        %s276 = scalar_lea.sflag [#allocation7], %s275
        %s277 = sand.u32 %s59, 1
        %s278 = smul.addr %s277, 8
        %s279 = scalar_lea.vmem [#allocation6], %s278
        %p280 = pneg %p72
        %p281 = pneg %p69
        %p282 = pneg %p93
        %p283 = pneg %p90
        %p284 = pneg %p114
        %p285 = pneg %p111
        %p286 = pneg %p140
        %p287 = pneg %p137
        %s288 = sand.u32 %s127, 1
        %s289 = scalar_lea.sflag [#allocation5], %s288
        %s290 = sand.u32 %s127, 1
        %s291 = smul.addr %s290, 16
        %s292 = scalar_lea.vmem [#allocation11], %s291
        %v294 = vld [vmem:[%s242] sm:$0xf]
        %v295 = vld [vmem:[%s242 + $0x4] sm:$0xf]
        %v296 = vld [vmem:[%s252] sm:$0xf]
        %v297 = vld [vmem:[%s252 + $0x4] sm:$0xf]
        %v298 = vunpack.c.l.bf16 %v296
        %v299 = vunpack.c.l.bf16 %v297
        %300 = vst [vmem:[#allocation2] sm:$0xff] 0.0
        %301 = vst [vmem:[#allocation2 + $0x8] sm:$0xff] 0.0
        %v302 = vld [vmem:[#allocation8] sm:$0xf]
        %v303 = vld [vmem:[#allocation8 + $0x4] sm:$0xf]
        %v304 = vunpack.c.l.bf16 %v302
        %v305 = vunpack.c.l.bf16 %v303
        %v306 = vmul.f32 %v304, %v298
        %v307 = vmul.f32 %v305, %v299
        %v308 = vpack.c.bf16 %v306, %v306
        %v309 = vpack.c.bf16 %v307, %v307
        %v312 = vunpack.c.l.b16 %v308
        %v313 = vunpack.c.l.b16 %v309
        %v314 = vpack.c.b16 %v313, %v312
        %v317 = vunpack.c.l.b16 %v294
        %v318 = vunpack.c.l.b16 %v295
        %v319 = vpack.c.b16 %v318, %v317
        %vm321 = vcmask 130048
        %v323 = vsel %vm321, %v314, 0
        %325 = vmatpush.bf16.msra.mxu0 0
        %326 = vmatpush.bf16.msra.mxu0 0
        %327 = vmatpush.bf16.msra.mxu0 0
        %328 = vmatpush.bf16.msra.mxu0 0
        %329 = vmatpush.bf16.msra.mxu0 0
        %330 = vmatpush.bf16.msra.mxu0 0
        %331 = vmatpush.bf16.msra.mxu0 0
        %332 = vmatpush.bf16.msra.mxu0 %v319
        %333 = vmatmul.bf16.gmra.mxu0 %v323
        %v334 = vpop.f32.mrf.mxu0
        %v335 = vadd.f32 0.0, %v334
        %v336 = vpop.f32.mrf.mxu0
        %v337 = vadd.f32 0.0, %v336
        %338 = vdwg.mxu0
        %v339 = vpack.c.bf16 %v335, %v335
        %v340 = vpack.c.bf16 %v337, %v337
        %v341 = vld [vmem:[#allocation9] sm:$0xf]
        %v342 = vld [vmem:[#allocation9 + $0x4] sm:$0xf]
        %v345 = vunpack.c.l.b16 %v339
        %v346 = vunpack.c.l.b16 %v340
        %v347 = vpack.c.b16 %v346, %v345
        %v350 = vunpack.c.l.b16 %v341
        %v351 = vunpack.c.l.b16 %v342
        %v352 = vpack.c.b16 %v351, %v350
        %v355 = vsel %vm321, %v347, 0
        %357 = vmatpush.bf16.msra.mxu0 0
        %358 = vmatpush.bf16.msra.mxu0 0
        %359 = vmatpush.bf16.msra.mxu0 0
        %360 = vmatpush.bf16.msra.mxu0 0
        %361 = vmatpush.bf16.msra.mxu0 0
        %362 = vmatpush.bf16.msra.mxu0 0
        %363 = vmatpush.bf16.msra.mxu0 0
        %364 = vmatpush.bf16.msra.mxu0 %v352
        %365 = vmatmul.bf16.gmra.mxu0 %v355
        %v366 = vpop.f32.mrf.mxu0
        %v367 = vadd.f32 0.0, %v366
        %v368 = vpop.f32.mrf.mxu0
        %v369 = vadd.f32 0.0, %v368
        %370 = vdwg.mxu0
        %v371 = vld [vmem:[#allocation2] sm:$0xff]
        %v372 = vld [vmem:[#allocation2 + $0x8] sm:$0xff]
        %v373 = vadd.f32 %v371, %v367
        %v374 = vadd.f32 %v372, %v369
        %375 = vst.msk [vmem:[#allocation2] sm:$0xff] %vm321, %v373
        %376 = vst.msk [vmem:[#allocation2 + $0x8] sm:$0xff] %vm321, %v374
        %377 = vrot.lane.b32.xlu0 %v347, 112
        %v378 = vpop.permute.xlu0 %377
        %v380 = vsel %vm321, %v378, 0
        %382 = vmatpush.bf16.msra.mxu0 0
        %383 = vmatpush.bf16.msra.mxu0 0
        %384 = vmatpush.bf16.msra.mxu0 0
        %385 = vmatpush.bf16.msra.mxu0 0
        %386 = vmatpush.bf16.msra.mxu0 0
        %387 = vmatpush.bf16.msra.mxu0 0
        %388 = vmatpush.bf16.msra.mxu0 0
        %389 = vmatpush.bf16.msra.mxu0 %v352
        %390 = vmatmul.bf16.gmra.mxu0 %v380
        %v391 = vpop.f32.mrf.mxu0
        %v392 = vadd.f32 0.0, %v391
        %v393 = vpop.f32.mrf.mxu0
        %v394 = vadd.f32 0.0, %v393
        %395 = vdwg.mxu0
        %v396 = vld [vmem:[#allocation2] sm:$0xff]
        %v397 = vld [vmem:[#allocation2 + $0x8] sm:$0xff]
        %400 = vrot.lane.b32.xlu0 %v392, 16
        %v401 = vpop.permute.xlu0 %400
        %402 = vrot.lane.b32.xlu0 %v394, 16
        %v403 = vpop.permute.xlu0 %402
        %v406 = vadd.f32 %v396, %v401
        %v407 = vadd.f32 %v397, %v403
        %vm408 = vcmask 261248
        %409 = vst.msk [vmem:[#allocation2] sm:$0xff] %vm408, %v406
        %410 = vst.msk [vmem:[#allocation2 + $0x8] sm:$0xff] %vm408, %v407
        %411 = vrot.lane.b32.xlu0 %v347, 96
        %v412 = vpop.permute.xlu0 %411
        %v414 = vsel %vm321, %v412, 0
        %416 = vmatpush.bf16.msra.mxu0 0
        %417 = vmatpush.bf16.msra.mxu0 0
        %418 = vmatpush.bf16.msra.mxu0 0
        %419 = vmatpush.bf16.msra.mxu0 0
        %420 = vmatpush.bf16.msra.mxu0 0
        %421 = vmatpush.bf16.msra.mxu0 0
        %422 = vmatpush.bf16.msra.mxu0 0
        %423 = vmatpush.bf16.msra.mxu0 %v352
        %424 = vmatmul.bf16.gmra.mxu0 %v414
        %v425 = vpop.f32.mrf.mxu0
        %v426 = vadd.f32 0.0, %v425
        %v427 = vpop.f32.mrf.mxu0
        %v428 = vadd.f32 0.0, %v427
        %429 = vdwg.mxu0
        %v430 = vld [vmem:[#allocation2] sm:$0xff]
        %v431 = vld [vmem:[#allocation2 + $0x8] sm:$0xff]
        %434 = vrot.lane.b32.xlu0 %v426, 32
        %v435 = vpop.permute.xlu0 %434
        %436 = vrot.lane.b32.xlu0 %v428, 32
        %v437 = vpop.permute.xlu0 %436
        %v440 = vadd.f32 %v430, %v435
        %v441 = vadd.f32 %v431, %v437
        %vm442 = vcmask 392448
        %443 = vst.msk [vmem:[#allocation2] sm:$0xff] %vm442, %v440
        %444 = vst.msk [vmem:[#allocation2 + $0x8] sm:$0xff] %vm442, %v441
        %445 = vrot.lane.b32.xlu0 %v347, 80
        %v446 = vpop.permute.xlu0 %445
        %v448 = vsel %vm321, %v446, 0
        %450 = vmatpush.bf16.msra.mxu0 0
        %451 = vmatpush.bf16.msra.mxu0 0
        %452 = vmatpush.bf16.msra.mxu0 0
        %453 = vmatpush.bf16.msra.mxu0 0
        %454 = vmatpush.bf16.msra.mxu0 0
        %455 = vmatpush.bf16.msra.mxu0 0
        %456 = vmatpush.bf16.msra.mxu0 0
        %457 = vmatpush.bf16.msra.mxu0 %v352
        %458 = vmatmul.bf16.gmra.mxu0 %v448
        %v459 = vpop.f32.mrf.mxu0
        %v460 = vadd.f32 0.0, %v459
        %v461 = vpop.f32.mrf.mxu0
        %v462 = vadd.f32 0.0, %v461
        %463 = vdwg.mxu0
        %v464 = vld [vmem:[#allocation2] sm:$0xff]
        %v465 = vld [vmem:[#allocation2 + $0x8] sm:$0xff]
        %468 = vrot.lane.b32.xlu0 %v460, 48
        %v469 = vpop.permute.xlu0 %468
        %470 = vrot.lane.b32.xlu0 %v462, 48
        %v471 = vpop.permute.xlu0 %470
        %v474 = vadd.f32 %v464, %v469
        %v475 = vadd.f32 %v465, %v471
        %vm476 = vcmask 523648
        %477 = vst.msk [vmem:[#allocation2] sm:$0xff] %vm476, %v474
        %478 = vst.msk [vmem:[#allocation2 + $0x8] sm:$0xff] %vm476, %v475
        %479 = vrot.lane.b32.xlu0 %v347, 64
        %v480 = vpop.permute.xlu0 %479
        %v482 = vsel %vm321, %v480, 0
        %484 = vmatpush.bf16.msra.mxu0 0
        %485 = vmatpush.bf16.msra.mxu0 0
        %486 = vmatpush.bf16.msra.mxu0 0
        %487 = vmatpush.bf16.msra.mxu0 0
        %488 = vmatpush.bf16.msra.mxu0 0
        %489 = vmatpush.bf16.msra.mxu0 0
        %490 = vmatpush.bf16.msra.mxu0 0
        %491 = vmatpush.bf16.msra.mxu0 %v352
        %492 = vmatmul.bf16.gmra.mxu0 %v482
        %v493 = vpop.f32.mrf.mxu0
        %v494 = vadd.f32 0.0, %v493
        %v495 = vpop.f32.mrf.mxu0
        %v496 = vadd.f32 0.0, %v495
        %497 = vdwg.mxu0
        %v498 = vld [vmem:[#allocation2] sm:$0xff]
        %v499 = vld [vmem:[#allocation2 + $0x8] sm:$0xff]
        %502 = vrot.lane.b32.xlu0 %v494, 64
        %v503 = vpop.permute.xlu0 %502
        %504 = vrot.lane.b32.xlu0 %v496, 64
        %v505 = vpop.permute.xlu0 %504
        %v508 = vadd.f32 %v498, %v503
        %v509 = vadd.f32 %v499, %v505
        %vm510 = vcmask 654848
        %511 = vst.msk [vmem:[#allocation2] sm:$0xff] %vm510, %v508
        %512 = vst.msk [vmem:[#allocation2 + $0x8] sm:$0xff] %vm510, %v509
        %513 = vrot.lane.b32.xlu0 %v347, 48
        %v514 = vpop.permute.xlu0 %513
        %v516 = vsel %vm321, %v514, 0
        %518 = vmatpush.bf16.msra.mxu0 0
        %519 = vmatpush.bf16.msra.mxu0 0
        %520 = vmatpush.bf16.msra.mxu0 0
        %521 = vmatpush.bf16.msra.mxu0 0
        %522 = vmatpush.bf16.msra.mxu0 0
        %523 = vmatpush.bf16.msra.mxu0 0
        %524 = vmatpush.bf16.msra.mxu0 0
        %525 = vmatpush.bf16.msra.mxu0 %v352
        %526 = vmatmul.bf16.gmra.mxu0 %v516
        %v527 = vpop.f32.mrf.mxu0
        %v528 = vadd.f32 0.0, %v527
        %v529 = vpop.f32.mrf.mxu0
        %v530 = vadd.f32 0.0, %v529
        %531 = vdwg.mxu0
        %v532 = vld [vmem:[#allocation2] sm:$0xff]
        %v533 = vld [vmem:[#allocation2 + $0x8] sm:$0xff]
        %536 = vrot.lane.b32.xlu0 %v528, 80
        %v537 = vpop.permute.xlu0 %536
        %538 = vrot.lane.b32.xlu0 %v530, 80
        %v539 = vpop.permute.xlu0 %538
        %v542 = vadd.f32 %v532, %v537
        %v543 = vadd.f32 %v533, %v539
        %vm544 = vcmask 786048
        %545 = vst.msk [vmem:[#allocation2] sm:$0xff] %vm544, %v542
        %546 = vst.msk [vmem:[#allocation2 + $0x8] sm:$0xff] %vm544, %v543
        %547 = vrot.lane.b32.xlu0 %v347, 32
        %v548 = vpop.permute.xlu0 %547
        %v550 = vsel %vm321, %v548, 0
        %552 = vmatpush.bf16.msra.mxu0 0
        %553 = vmatpush.bf16.msra.mxu0 0
        %554 = vmatpush.bf16.msra.mxu0 0
        %555 = vmatpush.bf16.msra.mxu0 0
        %556 = vmatpush.bf16.msra.mxu0 0
        %557 = vmatpush.bf16.msra.mxu0 0
        %558 = vmatpush.bf16.msra.mxu0 0
        %559 = vmatpush.bf16.msra.mxu0 %v352
        %560 = vmatmul.bf16.gmra.mxu0 %v550
        %v561 = vpop.f32.mrf.mxu0
        %v562 = vadd.f32 0.0, %v561
        %v563 = vpop.f32.mrf.mxu0
        %v564 = vadd.f32 0.0, %v563
        %565 = vdwg.mxu0
        %v566 = vld [vmem:[#allocation2] sm:$0xff]
        %v567 = vld [vmem:[#allocation2 + $0x8] sm:$0xff]
        %570 = vrot.lane.b32.xlu0 %v562, 96
        %v571 = vpop.permute.xlu0 %570
        %572 = vrot.lane.b32.xlu0 %v564, 96
        %v573 = vpop.permute.xlu0 %572
        %v576 = vadd.f32 %v566, %v571
        %v577 = vadd.f32 %v567, %v573
        %vm578 = vcmask 917248
        %579 = vst.msk [vmem:[#allocation2] sm:$0xff] %vm578, %v576
        %580 = vst.msk [vmem:[#allocation2 + $0x8] sm:$0xff] %vm578, %v577
        %581 = vrot.lane.b32.xlu0 %v347, 16
        %v582 = vpop.permute.xlu0 %581
        %v584 = vsel %vm321, %v582, 0
        %586 = vmatpush.bf16.msra.mxu0 0
        %587 = vmatpush.bf16.msra.mxu0 0
        %588 = vmatpush.bf16.msra.mxu0 0
        %589 = vmatpush.bf16.msra.mxu0 0
        %590 = vmatpush.bf16.msra.mxu0 0
        %591 = vmatpush.bf16.msra.mxu0 0
        %592 = vmatpush.bf16.msra.mxu0 0
        %593 = vmatpush.bf16.msra.mxu0 %v352
        %594 = vmatmul.bf16.gmra.mxu0 %v584
        %v595 = vpop.f32.mrf.mxu0
        %v596 = vadd.f32 0.0, %v595
        %v597 = vpop.f32.mrf.mxu0
        %v598 = vadd.f32 0.0, %v597
        %599 = vdwg.mxu0
        %v600 = vld [vmem:[#allocation2] sm:$0xff]
        %v601 = vld [vmem:[#allocation2 + $0x8] sm:$0xff]
        %604 = vrot.lane.b32.xlu0 %v596, 112
        %v605 = vpop.permute.xlu0 %604
        %606 = vrot.lane.b32.xlu0 %v598, 112
        %v607 = vpop.permute.xlu0 %606
        %v610 = vadd.f32 %v600, %v605
        %v611 = vadd.f32 %v601, %v607
        %vm612 = vcmask 1048448
        %613 = vst.msk [vmem:[#allocation2] sm:$0xff] %vm612, %v610
        %614 = vst.msk [vmem:[#allocation2 + $0x8] sm:$0xff] %vm612, %v611
        %s615 = scalar_lea.vmem [#allocation8], 8
        %v616 = vld [vmem:[%s615] sm:$0xf]
        %v617 = vld [vmem:[%s615 + $0x4] sm:$0xf]
        %v618 = vunpack.c.l.bf16 %v616
        %v619 = vunpack.c.l.bf16 %v617
        %v620 = vmul.f32 %v618, %v298
        %v621 = vmul.f32 %v619, %v299
        %v622 = vpack.c.bf16 %v620, %v620
        %v623 = vpack.c.bf16 %v621, %v621
        %v626 = vunpack.c.l.b16 %v622
        %v627 = vunpack.c.l.b16 %v623
        %v628 = vpack.c.b16 %v627, %v626
        %v630 = vsel %vm321, %v628, 0
        %632 = vmatpush.bf16.msra.mxu0 0
        %633 = vmatpush.bf16.msra.mxu0 0
        %634 = vmatpush.bf16.msra.mxu0 0
        %635 = vmatpush.bf16.msra.mxu0 0
        %636 = vmatpush.bf16.msra.mxu0 0
        %637 = vmatpush.bf16.msra.mxu0 0
        %638 = vmatpush.bf16.msra.mxu0 0
        %639 = vmatpush.bf16.msra.mxu0 %v319
        %640 = vmatmul.bf16.gmra.mxu0 %v630
        %v641 = vpop.f32.mrf.mxu0
        %v642 = vadd.f32 0.0, %v641
        %v643 = vpop.f32.mrf.mxu0
        %v644 = vadd.f32 0.0, %v643
        %645 = vdwg.mxu0
        %v646 = vpack.c.bf16 %v642, %v642
        %v647 = vpack.c.bf16 %v644, %v644
        %s648 = scalar_lea.vmem [#allocation9], 8
        %v649 = vld [vmem:[%s648] sm:$0xf]
        %v650 = vld [vmem:[%s648 + $0x4] sm:$0xf]
        %v653 = vunpack.c.l.b16 %v646
        %v654 = vunpack.c.l.b16 %v647
        %v655 = vpack.c.b16 %v654, %v653
        %v658 = vunpack.c.l.b16 %v649
        %v659 = vunpack.c.l.b16 %v650
        %v660 = vpack.c.b16 %v659, %v658
        %v663 = vsel %vm321, %v655, 0
        %665 = vmatpush.bf16.msra.mxu0 0
        %666 = vmatpush.bf16.msra.mxu0 0
        %667 = vmatpush.bf16.msra.mxu0 0
        %668 = vmatpush.bf16.msra.mxu0 0
        %669 = vmatpush.bf16.msra.mxu0 0
        %670 = vmatpush.bf16.msra.mxu0 0
        %671 = vmatpush.bf16.msra.mxu0 0
        %672 = vmatpush.bf16.msra.mxu0 %v660
        %673 = vmatmul.bf16.gmra.mxu0 %v663
        %v674 = vpop.f32.mrf.mxu0
        %v675 = vadd.f32 0.0, %v674
        %v676 = vpop.f32.mrf.mxu0
        %v677 = vadd.f32 0.0, %v676
        %678 = vdwg.mxu0
        %v679 = vld [vmem:[#allocation2] sm:$0xff]
        %v680 = vld [vmem:[#allocation2 + $0x8] sm:$0xff]
        %v681 = vadd.f32 %v679, %v675
        %v682 = vadd.f32 %v680, %v677
        %683 = vst.msk [vmem:[#allocation2] sm:$0xff] %vm321, %v681
        %684 = vst.msk [vmem:[#allocation2 + $0x8] sm:$0xff] %vm321, %v682
        %685 = vrot.lane.b32.xlu0 %v655, 112
        %v686 = vpop.permute.xlu0 %685
        %v688 = vsel %vm321, %v686, 0
        %690 = vmatpush.bf16.msra.mxu0 0
        %691 = vmatpush.bf16.msra.mxu0 0
        %692 = vmatpush.bf16.msra.mxu0 0
        %693 = vmatpush.bf16.msra.mxu0 0
        %694 = vmatpush.bf16.msra.mxu0 0
        %695 = vmatpush.bf16.msra.mxu0 0
        %696 = vmatpush.bf16.msra.mxu0 0
        %697 = vmatpush.bf16.msra.mxu0 %v660
        %698 = vmatmul.bf16.gmra.mxu0 %v688
        %v699 = vpop.f32.mrf.mxu0
        %v700 = vadd.f32 0.0, %v699
        %v701 = vpop.f32.mrf.mxu0
        %v702 = vadd.f32 0.0, %v701
        %703 = vdwg.mxu0
        %v704 = vld [vmem:[#allocation2] sm:$0xff]
        %v705 = vld [vmem:[#allocation2 + $0x8] sm:$0xff]
        %708 = vrot.lane.b32.xlu0 %v700, 16
        %v709 = vpop.permute.xlu0 %708
        %710 = vrot.lane.b32.xlu0 %v702, 16
        %v711 = vpop.permute.xlu0 %710
        %v714 = vadd.f32 %v704, %v709
        %v715 = vadd.f32 %v705, %v711
        %716 = vst.msk [vmem:[#allocation2] sm:$0xff] %vm408, %v714
        %717 = vst.msk [vmem:[#allocation2 + $0x8] sm:$0xff] %vm408, %v715
        %718 = vrot.lane.b32.xlu0 %v655, 96
        %v719 = vpop.permute.xlu0 %718
        %v721 = vsel %vm321, %v719, 0
        %723 = vmatpush.bf16.msra.mxu0 0
        %724 = vmatpush.bf16.msra.mxu0 0
        %725 = vmatpush.bf16.msra.mxu0 0
        %726 = vmatpush.bf16.msra.mxu0 0
        %727 = vmatpush.bf16.msra.mxu0 0
        %728 = vmatpush.bf16.msra.mxu0 0
        %729 = vmatpush.bf16.msra.mxu0 0
        %730 = vmatpush.bf16.msra.mxu0 %v660
        %731 = vmatmul.bf16.gmra.mxu0 %v721
        %v732 = vpop.f32.mrf.mxu0
        %v733 = vadd.f32 0.0, %v732
        %v734 = vpop.f32.mrf.mxu0
        %v735 = vadd.f32 0.0, %v734
        %736 = vdwg.mxu0
        %v737 = vld [vmem:[#allocation2] sm:$0xff]
        %v738 = vld [vmem:[#allocation2 + $0x8] sm:$0xff]
        %741 = vrot.lane.b32.xlu0 %v733, 32
        %v742 = vpop.permute.xlu0 %741
        %743 = vrot.lane.b32.xlu0 %v735, 32
        %v744 = vpop.permute.xlu0 %743
        %v747 = vadd.f32 %v737, %v742
        %v748 = vadd.f32 %v738, %v744
        %749 = vst.msk [vmem:[#allocation2] sm:$0xff] %vm442, %v747
        %750 = vst.msk [vmem:[#allocation2 + $0x8] sm:$0xff] %vm442, %v748
        %751 = vrot.lane.b32.xlu0 %v655, 80
        %v752 = vpop.permute.xlu0 %751
        %v754 = vsel %vm321, %v752, 0
        %756 = vmatpush.bf16.msra.mxu0 0
        %757 = vmatpush.bf16.msra.mxu0 0
        %758 = vmatpush.bf16.msra.mxu0 0
        %759 = vmatpush.bf16.msra.mxu0 0
        %760 = vmatpush.bf16.msra.mxu0 0
        %761 = vmatpush.bf16.msra.mxu0 0
        %762 = vmatpush.bf16.msra.mxu0 0
        %763 = vmatpush.bf16.msra.mxu0 %v660
        %764 = vmatmul.bf16.gmra.mxu0 %v754
        %v765 = vpop.f32.mrf.mxu0
        %v766 = vadd.f32 0.0, %v765
        %v767 = vpop.f32.mrf.mxu0
        %v768 = vadd.f32 0.0, %v767
        %769 = vdwg.mxu0
        %v770 = vld [vmem:[#allocation2] sm:$0xff]
        %v771 = vld [vmem:[#allocation2 + $0x8] sm:$0xff]
        %774 = vrot.lane.b32.xlu0 %v766, 48
        %v775 = vpop.permute.xlu0 %774
        %776 = vrot.lane.b32.xlu0 %v768, 48
        %v777 = vpop.permute.xlu0 %776
        %v780 = vadd.f32 %v770, %v775
        %v781 = vadd.f32 %v771, %v777
        %782 = vst.msk [vmem:[#allocation2] sm:$0xff] %vm476, %v780
        %783 = vst.msk [vmem:[#allocation2 + $0x8] sm:$0xff] %vm476, %v781
        %784 = vrot.lane.b32.xlu0 %v655, 64
        %v785 = vpop.permute.xlu0 %784
        %v787 = vsel %vm321, %v785, 0
        %789 = vmatpush.bf16.msra.mxu0 0
        %790 = vmatpush.bf16.msra.mxu0 0
        %791 = vmatpush.bf16.msra.mxu0 0
        %792 = vmatpush.bf16.msra.mxu0 0
        %793 = vmatpush.bf16.msra.mxu0 0
        %794 = vmatpush.bf16.msra.mxu0 0
        %795 = vmatpush.bf16.msra.mxu0 0
        %796 = vmatpush.bf16.msra.mxu0 %v660
        %797 = vmatmul.bf16.gmra.mxu0 %v787
        %v798 = vpop.f32.mrf.mxu0
        %v799 = vadd.f32 0.0, %v798
        %v800 = vpop.f32.mrf.mxu0
        %v801 = vadd.f32 0.0, %v800
        %802 = vdwg.mxu0
        %v803 = vld [vmem:[#allocation2] sm:$0xff]
        %v804 = vld [vmem:[#allocation2 + $0x8] sm:$0xff]
        %807 = vrot.lane.b32.xlu0 %v799, 64
        %v808 = vpop.permute.xlu0 %807
        %809 = vrot.lane.b32.xlu0 %v801, 64
        %v810 = vpop.permute.xlu0 %809
        %v813 = vadd.f32 %v803, %v808
        %v814 = vadd.f32 %v804, %v810
        %815 = vst.msk [vmem:[#allocation2] sm:$0xff] %vm510, %v813
        %816 = vst.msk [vmem:[#allocation2 + $0x8] sm:$0xff] %vm510, %v814
        %817 = vrot.lane.b32.xlu0 %v655, 48
        %v818 = vpop.permute.xlu0 %817
        %v820 = vsel %vm321, %v818, 0
        %822 = vmatpush.bf16.msra.mxu0 0
        %823 = vmatpush.bf16.msra.mxu0 0
        %824 = vmatpush.bf16.msra.mxu0 0
        %825 = vmatpush.bf16.msra.mxu0 0
        %826 = vmatpush.bf16.msra.mxu0 0
        %827 = vmatpush.bf16.msra.mxu0 0
        %828 = vmatpush.bf16.msra.mxu0 0
        %829 = vmatpush.bf16.msra.mxu0 %v660
        %830 = vmatmul.bf16.gmra.mxu0 %v820
        %v831 = vpop.f32.mrf.mxu0
        %v832 = vadd.f32 0.0, %v831
        %v833 = vpop.f32.mrf.mxu0
        %v834 = vadd.f32 0.0, %v833
        %835 = vdwg.mxu0
        %v836 = vld [vmem:[#allocation2] sm:$0xff]
        %v837 = vld [vmem:[#allocation2 + $0x8] sm:$0xff]
        %840 = vrot.lane.b32.xlu0 %v832, 80
        %v841 = vpop.permute.xlu0 %840
        %842 = vrot.lane.b32.xlu0 %v834, 80
        %v843 = vpop.permute.xlu0 %842
        %v846 = vadd.f32 %v836, %v841
        %v847 = vadd.f32 %v837, %v843
        %848 = vst.msk [vmem:[#allocation2] sm:$0xff] %vm544, %v846
        %849 = vst.msk [vmem:[#allocation2 + $0x8] sm:$0xff] %vm544, %v847
        %850 = vrot.lane.b32.xlu0 %v655, 32
        %v851 = vpop.permute.xlu0 %850
        %v853 = vsel %vm321, %v851, 0
        %855 = vmatpush.bf16.msra.mxu0 0
        %856 = vmatpush.bf16.msra.mxu0 0
        %857 = vmatpush.bf16.msra.mxu0 0
        %858 = vmatpush.bf16.msra.mxu0 0
        %859 = vmatpush.bf16.msra.mxu0 0
        %860 = vmatpush.bf16.msra.mxu0 0
        %861 = vmatpush.bf16.msra.mxu0 0
        %862 = vmatpush.bf16.msra.mxu0 %v660
        %863 = vmatmul.bf16.gmra.mxu0 %v853
        %v864 = vpop.f32.mrf.mxu0
        %v865 = vadd.f32 0.0, %v864
        %v866 = vpop.f32.mrf.mxu0
        %v867 = vadd.f32 0.0, %v866
        %868 = vdwg.mxu0
        %v869 = vld [vmem:[#allocation2] sm:$0xff]
        %v870 = vld [vmem:[#allocation2 + $0x8] sm:$0xff]
        %873 = vrot.lane.b32.xlu0 %v865, 96
        %v874 = vpop.permute.xlu0 %873
        %875 = vrot.lane.b32.xlu0 %v867, 96
        %v876 = vpop.permute.xlu0 %875
        %v879 = vadd.f32 %v869, %v874
        %v880 = vadd.f32 %v870, %v876
        %881 = vst.msk [vmem:[#allocation2] sm:$0xff] %vm578, %v879
        %882 = vst.msk [vmem:[#allocation2 + $0x8] sm:$0xff] %vm578, %v880
        %883 = vrot.lane.b32.xlu0 %v655, 16
        %v884 = vpop.permute.xlu0 %883
        %v886 = vsel %vm321, %v884, 0
        %888 = vmatpush.bf16.msra.mxu0 0
        %889 = vmatpush.bf16.msra.mxu0 0
        %890 = vmatpush.bf16.msra.mxu0 0
        %891 = vmatpush.bf16.msra.mxu0 0
        %892 = vmatpush.bf16.msra.mxu0 0
        %893 = vmatpush.bf16.msra.mxu0 0
        %894 = vmatpush.bf16.msra.mxu0 0
        %895 = vmatpush.bf16.msra.mxu0 %v660
        %896 = vmatmul.bf16.gmra.mxu0 %v886
        %v897 = vpop.f32.mrf.mxu0
        %v898 = vadd.f32 0.0, %v897
        %v899 = vpop.f32.mrf.mxu0
        %v900 = vadd.f32 0.0, %v899
        %901 = vdwg.mxu0
        %v902 = vld [vmem:[#allocation2] sm:$0xff]
        %v903 = vld [vmem:[#allocation2 + $0x8] sm:$0xff]
        %906 = vrot.lane.b32.xlu0 %v898, 112
        %v907 = vpop.permute.xlu0 %906
        %908 = vrot.lane.b32.xlu0 %v900, 112
        %v909 = vpop.permute.xlu0 %908
        %v912 = vadd.f32 %v902, %v907
        %v913 = vadd.f32 %v903, %v909
        %914 = vst.msk [vmem:[#allocation2] sm:$0xff] %vm612, %v912
        %915 = vst.msk [vmem:[#allocation2 + $0x8] sm:$0xff] %vm612, %v913
        %s916 = scalar_lea.vmem [#allocation8], 16
        %v917 = vld [vmem:[%s916] sm:$0xf]
        %v918 = vld [vmem:[%s916 + $0x4] sm:$0xf]
        %v919 = vunpack.c.l.bf16 %v917
        %v920 = vunpack.c.l.bf16 %v918
        %v921 = vmul.f32 %v919, %v298
        %v922 = vmul.f32 %v920, %v299
        %v923 = vpack.c.bf16 %v921, %v921
        %v924 = vpack.c.bf16 %v922, %v922
        %v927 = vunpack.c.l.b16 %v923
        %v928 = vunpack.c.l.b16 %v924
        %v929 = vpack.c.b16 %v928, %v927
        %v931 = vsel %vm321, %v929, 0
        %933 = vmatpush.bf16.msra.mxu0 0
        %934 = vmatpush.bf16.msra.mxu0 0
        %935 = vmatpush.bf16.msra.mxu0 0
        %936 = vmatpush.bf16.msra.mxu0 0
        %937 = vmatpush.bf16.msra.mxu0 0
        %938 = vmatpush.bf16.msra.mxu0 0
        %939 = vmatpush.bf16.msra.mxu0 0
        %940 = vmatpush.bf16.msra.mxu0 %v319
        %941 = vmatmul.bf16.gmra.mxu0 %v931
        %v942 = vpop.f32.mrf.mxu0
        %v943 = vadd.f32 0.0, %v942
        %v944 = vpop.f32.mrf.mxu0
        %v945 = vadd.f32 0.0, %v944
        %946 = vdwg.mxu0
        %v947 = vpack.c.bf16 %v943, %v943
        %v948 = vpack.c.bf16 %v945, %v945
        %s949 = scalar_lea.vmem [#allocation9], 16
        %v950 = vld [vmem:[%s949] sm:$0xf]
        %v951 = vld [vmem:[%s949 + $0x4] sm:$0xf]
        %v954 = vunpack.c.l.b16 %v947
        %v955 = vunpack.c.l.b16 %v948
        %v956 = vpack.c.b16 %v955, %v954
        %v959 = vunpack.c.l.b16 %v950
        %v960 = vunpack.c.l.b16 %v951
        %v961 = vpack.c.b16 %v960, %v959
        %v964 = vsel %vm321, %v956, 0
        %966 = vmatpush.bf16.msra.mxu0 0
        %967 = vmatpush.bf16.msra.mxu0 0
        %968 = vmatpush.bf16.msra.mxu0 0
        %969 = vmatpush.bf16.msra.mxu0 0
        %970 = vmatpush.bf16.msra.mxu0 0
        %971 = vmatpush.bf16.msra.mxu0 0
        %972 = vmatpush.bf16.msra.mxu0 0
        %973 = vmatpush.bf16.msra.mxu0 %v961
        %974 = vmatmul.bf16.gmra.mxu0 %v964
        %v975 = vpop.f32.mrf.mxu0
        %v976 = vadd.f32 0.0, %v975
        %v977 = vpop.f32.mrf.mxu0
        %v978 = vadd.f32 0.0, %v977
        %979 = vdwg.mxu0
        %v980 = vld [vmem:[#allocation2] sm:$0xff]
        %v981 = vld [vmem:[#allocation2 + $0x8] sm:$0xff]
        %v982 = vadd.f32 %v980, %v976
        %v983 = vadd.f32 %v981, %v978
        %984 = vst.msk [vmem:[#allocation2] sm:$0xff] %vm321, %v982
        %985 = vst.msk [vmem:[#allocation2 + $0x8] sm:$0xff] %vm321, %v983
        %986 = vrot.lane.b32.xlu0 %v956, 112
        %v987 = vpop.permute.xlu0 %986
        %v989 = vsel %vm321, %v987, 0
        %991 = vmatpush.bf16.msra.mxu0 0
        %992 = vmatpush.bf16.msra.mxu0 0
        %993 = vmatpush.bf16.msra.mxu0 0
        %994 = vmatpush.bf16.msra.mxu0 0
        %995 = vmatpush.bf16.msra.mxu0 0
        %996 = vmatpush.bf16.msra.mxu0 0
        %997 = vmatpush.bf16.msra.mxu0 0
        %998 = vmatpush.bf16.msra.mxu0 %v961
        %999 = vmatmul.bf16.gmra.mxu0 %v989
        %v1000 = vpop.f32.mrf.mxu0
        %v1001 = vadd.f32 0.0, %v1000
        %v1002 = vpop.f32.mrf.mxu0
        %v1003 = vadd.f32 0.0, %v1002
        %1004 = vdwg.mxu0
        %v1005 = vld [vmem:[#allocation2] sm:$0xff]
        %v1006 = vld [vmem:[#allocation2 + $0x8] sm:$0xff]
        %1009 = vrot.lane.b32.xlu0 %v1001, 16
        %v1010 = vpop.permute.xlu0 %1009
        %1011 = vrot.lane.b32.xlu0 %v1003, 16
        %v1012 = vpop.permute.xlu0 %1011
        %v1015 = vadd.f32 %v1005, %v1010
        %v1016 = vadd.f32 %v1006, %v1012
        %1017 = vst.msk [vmem:[#allocation2] sm:$0xff] %vm408, %v1015
        %1018 = vst.msk [vmem:[#allocation2 + $0x8] sm:$0xff] %vm408, %v1016
        %1019 = vrot.lane.b32.xlu0 %v956, 96
        %v1020 = vpop.permute.xlu0 %1019
        %v1022 = vsel %vm321, %v1020, 0
        %1024 = vmatpush.bf16.msra.mxu0 0
        %1025 = vmatpush.bf16.msra.mxu0 0
        %1026 = vmatpush.bf16.msra.mxu0 0
        %1027 = vmatpush.bf16.msra.mxu0 0
        %1028 = vmatpush.bf16.msra.mxu0 0
        %1029 = vmatpush.bf16.msra.mxu0 0
        %1030 = vmatpush.bf16.msra.mxu0 0
        %1031 = vmatpush.bf16.msra.mxu0 %v961
        %1032 = vmatmul.bf16.gmra.mxu0 %v1022
        %v1033 = vpop.f32.mrf.mxu0
        %v1034 = vadd.f32 0.0, %v1033
        %v1035 = vpop.f32.mrf.mxu0
        %v1036 = vadd.f32 0.0, %v1035
        %1037 = vdwg.mxu0
        %v1038 = vld [vmem:[#allocation2] sm:$0xff]
        %v1039 = vld [vmem:[#allocation2 + $0x8] sm:$0xff]
        %1042 = vrot.lane.b32.xlu0 %v1034, 32
        %v1043 = vpop.permute.xlu0 %1042
        %1044 = vrot.lane.b32.xlu0 %v1036, 32
        %v1045 = vpop.permute.xlu0 %1044
        %v1048 = vadd.f32 %v1038, %v1043
        %v1049 = vadd.f32 %v1039, %v1045
        %1050 = vst.msk [vmem:[#allocation2] sm:$0xff] %vm442, %v1048
        %1051 = vst.msk [vmem:[#allocation2 + $0x8] sm:$0xff] %vm442, %v1049
        %1052 = vrot.lane.b32.xlu0 %v956, 80
        %v1053 = vpop.permute.xlu0 %1052
        %v1055 = vsel %vm321, %v1053, 0
        %1057 = vmatpush.bf16.msra.mxu0 0
        %1058 = vmatpush.bf16.msra.mxu0 0
        %1059 = vmatpush.bf16.msra.mxu0 0
        %1060 = vmatpush.bf16.msra.mxu0 0
        %1061 = vmatpush.bf16.msra.mxu0 0
        %1062 = vmatpush.bf16.msra.mxu0 0
        %1063 = vmatpush.bf16.msra.mxu0 0
        %1064 = vmatpush.bf16.msra.mxu0 %v961
        %1065 = vmatmul.bf16.gmra.mxu0 %v1055
        %v1066 = vpop.f32.mrf.mxu0
        %v1067 = vadd.f32 0.0, %v1066
        %v1068 = vpop.f32.mrf.mxu0
        %v1069 = vadd.f32 0.0, %v1068
        %1070 = vdwg.mxu0
        %v1071 = vld [vmem:[#allocation2] sm:$0xff]
        %v1072 = vld [vmem:[#allocation2 + $0x8] sm:$0xff]
        %1075 = vrot.lane.b32.xlu0 %v1067, 48
        %v1076 = vpop.permute.xlu0 %1075
        %1077 = vrot.lane.b32.xlu0 %v1069, 48
        %v1078 = vpop.permute.xlu0 %1077
        %v1081 = vadd.f32 %v1071, %v1076
        %v1082 = vadd.f32 %v1072, %v1078
        %1083 = vst.msk [vmem:[#allocation2] sm:$0xff] %vm476, %v1081
        %1084 = vst.msk [vmem:[#allocation2 + $0x8] sm:$0xff] %vm476, %v1082
        %1085 = vrot.lane.b32.xlu0 %v956, 64
        %v1086 = vpop.permute.xlu0 %1085
        %v1088 = vsel %vm321, %v1086, 0
        %1090 = vmatpush.bf16.msra.mxu0 0
        %1091 = vmatpush.bf16.msra.mxu0 0
        %1092 = vmatpush.bf16.msra.mxu0 0
        %1093 = vmatpush.bf16.msra.mxu0 0
        %1094 = vmatpush.bf16.msra.mxu0 0
        %1095 = vmatpush.bf16.msra.mxu0 0
        %1096 = vmatpush.bf16.msra.mxu0 0
        %1097 = vmatpush.bf16.msra.mxu0 %v961
        %1098 = vmatmul.bf16.gmra.mxu0 %v1088
        %v1099 = vpop.f32.mrf.mxu0
        %v1100 = vadd.f32 0.0, %v1099
        %v1101 = vpop.f32.mrf.mxu0
        %v1102 = vadd.f32 0.0, %v1101
        %1103 = vdwg.mxu0
        %v1104 = vld [vmem:[#allocation2] sm:$0xff]
        %v1105 = vld [vmem:[#allocation2 + $0x8] sm:$0xff]
        %1108 = vrot.lane.b32.xlu0 %v1100, 64
        %v1109 = vpop.permute.xlu0 %1108
        %1110 = vrot.lane.b32.xlu0 %v1102, 64
        %v1111 = vpop.permute.xlu0 %1110
        %v1114 = vadd.f32 %v1104, %v1109
        %v1115 = vadd.f32 %v1105, %v1111
        %1116 = vst.msk [vmem:[#allocation2] sm:$0xff] %vm510, %v1114
        %1117 = vst.msk [vmem:[#allocation2 + $0x8] sm:$0xff] %vm510, %v1115
        %1118 = vrot.lane.b32.xlu0 %v956, 48
        %v1119 = vpop.permute.xlu0 %1118
        %v1121 = vsel %vm321, %v1119, 0
        %1123 = vmatpush.bf16.msra.mxu0 0
        %1124 = vmatpush.bf16.msra.mxu0 0
        %1125 = vmatpush.bf16.msra.mxu0 0
        %1126 = vmatpush.bf16.msra.mxu0 0
        %1127 = vmatpush.bf16.msra.mxu0 0
        %1128 = vmatpush.bf16.msra.mxu0 0
        %1129 = vmatpush.bf16.msra.mxu0 0
        %1130 = vmatpush.bf16.msra.mxu0 %v961
        %1131 = vmatmul.bf16.gmra.mxu0 %v1121
        %v1132 = vpop.f32.mrf.mxu0
        %v1133 = vadd.f32 0.0, %v1132
        %v1134 = vpop.f32.mrf.mxu0
        %v1135 = vadd.f32 0.0, %v1134
        %1136 = vdwg.mxu0
        %v1137 = vld [vmem:[#allocation2] sm:$0xff]
        %v1138 = vld [vmem:[#allocation2 + $0x8] sm:$0xff]
        %1141 = vrot.lane.b32.xlu0 %v1133, 80
        %v1142 = vpop.permute.xlu0 %1141
        %1143 = vrot.lane.b32.xlu0 %v1135, 80
        %v1144 = vpop.permute.xlu0 %1143
        %v1147 = vadd.f32 %v1137, %v1142
        %v1148 = vadd.f32 %v1138, %v1144
        %1149 = vst.msk [vmem:[#allocation2] sm:$0xff] %vm544, %v1147
        %1150 = vst.msk [vmem:[#allocation2 + $0x8] sm:$0xff] %vm544, %v1148
        %1151 = vrot.lane.b32.xlu0 %v956, 32
        %v1152 = vpop.permute.xlu0 %1151
        %v1154 = vsel %vm321, %v1152, 0
        %1156 = vmatpush.bf16.msra.mxu0 0
        %1157 = vmatpush.bf16.msra.mxu0 0
        %1158 = vmatpush.bf16.msra.mxu0 0
        %1159 = vmatpush.bf16.msra.mxu0 0
        %1160 = vmatpush.bf16.msra.mxu0 0
        %1161 = vmatpush.bf16.msra.mxu0 0
        %1162 = vmatpush.bf16.msra.mxu0 0
        %1163 = vmatpush.bf16.msra.mxu0 %v961
        %1164 = vmatmul.bf16.gmra.mxu0 %v1154
        %v1165 = vpop.f32.mrf.mxu0
        %v1166 = vadd.f32 0.0, %v1165
        %v1167 = vpop.f32.mrf.mxu0
        %v1168 = vadd.f32 0.0, %v1167
        %1169 = vdwg.mxu0
        %v1170 = vld [vmem:[#allocation2] sm:$0xff]
        %v1171 = vld [vmem:[#allocation2 + $0x8] sm:$0xff]
        %1174 = vrot.lane.b32.xlu0 %v1166, 96
        %v1175 = vpop.permute.xlu0 %1174
        %1176 = vrot.lane.b32.xlu0 %v1168, 96
        %v1177 = vpop.permute.xlu0 %1176
        %v1180 = vadd.f32 %v1170, %v1175
        %v1181 = vadd.f32 %v1171, %v1177
        %1182 = vst.msk [vmem:[#allocation2] sm:$0xff] %vm578, %v1180
        %1183 = vst.msk [vmem:[#allocation2 + $0x8] sm:$0xff] %vm578, %v1181
        %1184 = vrot.lane.b32.xlu0 %v956, 16
        %v1185 = vpop.permute.xlu0 %1184
        %v1187 = vsel %vm321, %v1185, 0
        %1189 = vmatpush.bf16.msra.mxu0 0
        %1190 = vmatpush.bf16.msra.mxu0 0
        %1191 = vmatpush.bf16.msra.mxu0 0
        %1192 = vmatpush.bf16.msra.mxu0 0
        %1193 = vmatpush.bf16.msra.mxu0 0
        %1194 = vmatpush.bf16.msra.mxu0 0
        %1195 = vmatpush.bf16.msra.mxu0 0
        %1196 = vmatpush.bf16.msra.mxu0 %v961
        %1197 = vmatmul.bf16.gmra.mxu0 %v1187
        %v1198 = vpop.f32.mrf.mxu0
        %v1199 = vadd.f32 0.0, %v1198
        %v1200 = vpop.f32.mrf.mxu0
        %v1201 = vadd.f32 0.0, %v1200
        %1202 = vdwg.mxu0
        %v1203 = vld [vmem:[#allocation2] sm:$0xff]
        %v1204 = vld [vmem:[#allocation2 + $0x8] sm:$0xff]
        %1207 = vrot.lane.b32.xlu0 %v1199, 112
        %v1208 = vpop.permute.xlu0 %1207
        %1209 = vrot.lane.b32.xlu0 %v1201, 112
        %v1210 = vpop.permute.xlu0 %1209
        %v1213 = vadd.f32 %v1203, %v1208
        %v1214 = vadd.f32 %v1204, %v1210
        %1215 = vst.msk [vmem:[#allocation2] sm:$0xff] %vm612, %v1213
        %1216 = vst.msk [vmem:[#allocation2 + $0x8] sm:$0xff] %vm612, %v1214
        %v1217 = vld [vmem:[#allocation2] sm:$0xff]
        %v1218 = vld [vmem:[#allocation2 + $0x8] sm:$0xff]
        %v1219 = vmax.f32 %v1217, 0.0
        %v1220 = vmax.f32 %v1218, 0.0
        %1221 = vst [vmem:[%s292] sm:$0xff] %v1219
        %1222 = vst [vmem:[%s292 + $0x8] sm:$0xff] %v1220
        %s1223 = sand.u32 %s127, 1
        %s1224 = scalar_lea.sflag [#allocation5], %s1223
        %s1225 = sand.u32 %s127, 1
        %s1226 = smul.addr %s1225, 16
        %s1227 = scalar_lea.vmem [#allocation11], %s1226
        // Predicated region
        $region53: #{tpu_custom_call.1} parent=35 // pred_check
          %p1228 = pneg %p137
        $region54: #{tpu_custom_call.1} parent=35 // pred_check_branch
          %1230 = sbr.rel (%p1228) target = $region56
        $region55: #{tpu_custom_call.1} parent=35 // pred_region
          %1232 = vsyncadd %s1224, 0
          %s1233 = smul.addr %s25, 2
          %s1234 = smul.addr %s1233, 8
          %s1235 = scalar_lea.hbm %s4, %s1234
          %s1236 = sshll.u32 %s1227, 4
          %s1237 = int_to_ptr.vmem [resolvable:$true] %s1236
          %s1238 = sshll.u32 %s1235, 4
          %s1239 = int_to_ptr.hbm [resolvable:$true] %s1238
          %1244 = dma.vmem_to_hbm [thread:$0]  %s1237, 256, %s1239, %s1224, 128, 128, 8
        $region56: #{tpu_custom_call.1} parent=35 // pred_fallthru
          _
      $region36: #{tpu_custom_call.1} parent=5 // pred_fallthru
        _
      %p1245 = scmp.le.s32.totalorder 2, %s20
      // Predicated region
      $region57: #{tpu_custom_call.1} parent=5 // pred_check
        %p1246 = pneg %p1245
      $region58: #{tpu_custom_call.1} parent=5 // pred_check_branch
        %1248 = sbr.rel (%p1246) target = $region60
      $region59: #{tpu_custom_call.1} parent=5 // pred_region
        %s1249 = ssub.s32 %s20, 2
        // Predicated region
        $region61: #{tpu_custom_call.1} parent=59 // pred_check
          %p1250 = pneg %p143
        $region62: #{tpu_custom_call.1} parent=59 // pred_check_branch
          %1252 = sbr.rel (%p1250) target = $region64
        $region63: #{tpu_custom_call.1} parent=59 // pred_region
          %s1253 = sand.u32 %s128, 1
          %s1254 = scalar_lea.sflag [#allocation5], %s1253
          %s1255 = sand.u32 %s128, 1
          %s1256 = smul.addr %s1255, 16
          %s1257 = scalar_lea.vmem [#allocation11], %s1256
          %1259 = dma.done %s1254, 256
        $region64: #{tpu_custom_call.1} parent=59 // pred_fallthru
          _
      $region60: #{tpu_custom_call.1} parent=5 // pred_fallthru
        _
    $region6: #{tpu_custom_call.1} parent=1 // loop_footer
      %s24 = sadd.s32 1, %s20
    $region7: #{tpu_custom_call.1} parent=1 // loop_footer_branch
      %19 = sbr.rel target = $region3
    $region8: #{tpu_custom_call.1} parent=1 // loop_exit
      _
    %1260 = vsyncpa [#allocation4], 1
    %s1261 = scalar_lea.sflag [#allocation4], 1
    %1262 = vsyncpa %s1261, 1
    %1263 = vsyncpa [#allocation7], 1
    %s1264 = scalar_lea.sflag [#allocation7], 1
    %1265 = vsyncpa %s1264, 1
    %1266 = vsyncpa [#allocation10], 1
    %1267 = vsyncpa [#allocation5], 1
    %s1268 = scalar_lea.sflag [#allocation5], 1
    %1269 = vsyncpa %s1268, 1

</llo_original>
